<compile_context>
chip_gen: v6e
topology: v6e:2x2x1
jax: 0.10.0
libtpu: 0.0.40
codegen_flags: <defaults>
</compile_context>

<pallas_src>
import numpy as np
import jax
import jax.numpy as jnp
from jax.experimental import pallas as pl
from jax.experimental.pallas import tpu as pltpu

# ----------------------------------------------------------------------------
# coif2 filters (pywt convention): rec_lo = reverse(dec_lo), rec_hi[k]=(-1)^k dec_lo[k]
# ----------------------------------------------------------------------------
_COIF2_DEC_LO = np.array([
    -0.0007205494453645122, -0.0018232088707029932, 0.0056114348193944995,
    0.023680171946334084, -0.0594344186464569, -0.0764885990783064,
    0.41700518442169254, 0.8127236354455423, 0.3861100668211622,
    -0.06737255472196302, -0.04146493678175915, 0.016387336463522112,
], dtype=np.float64)
_COIF2_REC_LO = _COIF2_DEC_LO[::-1].copy()
_COIF2_REC_HI = np.array([(-1.0) ** k * _COIF2_DEC_LO[k] for k in range(12)],
                         dtype=np.float64)
_FILT_LEN = 12


def _round_up(x, m):
    return ((x + m - 1) // m) * m


# ----------------------------------------------------------------------------
# Host-side (trace-time) matrix builders — all static numpy.
# ----------------------------------------------------------------------------
def _synth_matrix(g, n_in):
    """Matrix G (n_in, n_out) for conv_transpose1d(stride=2, padding=L-2): y = x @ G."""
    L = g.shape[0]
    p = L - 2
    n_out = 2 * n_in - L + 2
    M = np.zeros((n_in, n_out), dtype=np.float32)
    for k in range(n_in):
        for m in range(n_out):
            idx = m + p - 2 * k
            if 0 <= idx < L:
                M[k, m] = g[idx]
    return M


def _bilinear_matrix(n_in, n_out):
    """F.interpolate(mode='bilinear', align_corners=False) resampling matrix."""
    W = np.zeros((n_out, n_in), dtype=np.float32)
    scale = n_in / n_out
    for i in range(n_out):
        src = max((i + 0.5) * scale - 0.5, 0.0)
        i0 = int(np.floor(src))
        i1 = min(i0 + 1, n_in - 1)
        frac = src - i0
        W[i, i0] += (1.0 - frac)
        W[i, i1] += frac
    return W


def _nearest_matrix(n_in, n_out):
    """F.interpolate(mode='nearest') selection matrix (exact integer index math)."""
    S = np.zeros((n_out, n_in), dtype=np.float32)
    for i in range(n_out):
        src = min((i * n_in) // n_out, n_in - 1)
        S[i, src] = 1.0
    return S


def _choose_down_size(num_rows, num_cols, num_step, cur_iteration, plan):
    fac = 2 ** num_step
    n = 3
    s_rows = num_rows * fac // 2 ** (n - 1)
    s_cols = num_cols * fac // 2 ** (n - 1)
    if cur_iteration < plan[0]:
        return s_rows, s_cols
    if cur_iteration >= plan[2]:
        return s_rows * 4, s_cols * 4
    # TODO(synk): blended coarse-to-fine branches are not implemented.
    raise NotImplementedError("blended c2f branch not implemented")


def _resample_mats(H0, W0, dh, dw, height, width):
    Wh = _bilinear_matrix(H0, dh)        # (dh, H0)
    Ww = _bilinear_matrix(W0, dw)        # (dw, W0)
    Sh = _nearest_matrix(dh, height)     # (height, dh)
    Sw = _nearest_matrix(dw, width)      # (width, dw)
    Mh = (Sh @ Wh).astype(np.float32)        # (height, H0)
    MwT = ((Sw @ Ww).T).astype(np.float32)   # (W0, width)
    return Mh, MwT


# ----------------------------------------------------------------------------
# Static per-level plan (coarsest level first) and constant matrices.
# ----------------------------------------------------------------------------
def _build_levels(yl_hw, yh_hw):
    assert len(yh_hw) >= 1, "at least one wavelet level is required"
    levels = []
    hp, wp = yl_hw
    for li, (h, w) in enumerate(reversed(list(yh_hw))):
        first = (li == 0)
        assert h <= hp <= h + 1 and w <= wp <= w + 1, "invalid DWT pyramid"
        hp_b = h if first else hp        # level 0: Yl crop done on the host
        ho = 2 * h - _FILT_LEN + 2
        wo = 2 * w - _FILT_LEN + 2
        HP8 = _round_up(hp_b, 8)
        K8 = _round_up(HP8 + h, 8)
        HO8 = _round_up(ho, 8)
        levels.append(dict(first=first, h=h, w=w, hp=hp_b, ho=ho, wo=wo,
                           HP8=HP8, K8=K8, HO8=HO8))
        hp, wp = ho, wo
    for li, lev in enumerate(levels):
        if li + 1 < len(levels):
            wn = levels[li + 1]['w']
            assert wn <= lev['wo'] <= wn + 1
            lev['last'] = False
            lev['w_next'] = wn
            lev['out_cols'] = 2 * wn     # next level's spread layout (crop folded in)
        else:
            lev['last'] = True
            lev['out_cols'] = lev['wo']
    H0, W0 = levels[-1]['ho'], levels[-1]['wo']
    return levels, H0, W0


def _level_mats(lev):
    """Column-synthesis matrix [G0cT | 0 | G1cT] and row-synthesis block [Gr0; Gr1]."""
    h, w, HP8 = lev['h'], lev['w'], lev['HP8']
    ho = lev['ho']
    G0cT = _synth_matrix(_COIF2_REC_LO, h).T     # (ho, h)
    G1cT = _synth_matrix(_COIF2_REC_HI, h).T     # (ho, h)
    Gfull = np.zeros((ho, HP8 + h), np.float32)
    Gfull[:, :h] = G0cT                          # zero cols [h, HP8): row crop + padding
    Gfull[:, HP8:HP8 + h] = G1cT
    Gr0 = _synth_matrix(_COIF2_REC_LO, w)        # (w, wo)
    Gr1 = _synth_matrix(_COIF2_REC_HI, w)
    R = np.zeros((2 * w, lev['out_cols']), np.float32)
    if lev['last']:
        R[:w, :] = 0.5 * Gr0                     # clamp((img+1)/2)'s 0.5 folded in
        R[w:, :] = 0.5 * Gr1
    else:
        wn = lev['w_next']
        R[:w, :wn] = Gr0[:, :wn]                 # width crop folded in; odd half stays 0
        R[w:, :wn] = Gr1[:, :wn]
    return Gfull, R


def _pack_const_pool(mats):
    """Sublane-stack matrices at 8-aligned offsets, lane-pad to a 128 multiple."""
    PW = _round_up(max(m.shape[1] for m in mats), 128)
    offs, row = [], 0
    for m in mats:
        offs.append(row)
        row += _round_up(m.shape[0], 8)
    pool = np.zeros((max(row, 8), PW), np.float32)
    for m, off in zip(mats, offs):
        pool[off:off + m.shape[0], :m.shape[1]] = np.asarray(m, np.float32)
    return pool, offs


# ----------------------------------------------------------------------------
# Data-pool packing (runs under jit; layout plumbing, not compute).
# ----------------------------------------------------------------------------
def _spread_pair(a, b):
    """(3,h,w) x 2 -> (h, 6w): channel c gets lanes [2cw,2cw+w)=a_c, [2cw+w,2cw+2w)=b_c."""
    c, h, w = a.shape
    x = jnp.stack([a, b], axis=1)            # (3, 2, h, w)
    x = jnp.transpose(x, (2, 0, 1, 3))       # (h, 3, 2, w)
    return x.reshape(h, 2 * c * w)


def _make_data_packer(levels, PW_d):
    def pack(yl, yh):
        f32 = jnp.float32
        yh_rev = list(reversed(yh))          # coarsest first, matching `levels`
        blocks = []
        for lev, highs in zip(levels, yh_rev):
            h, w = lev['h'], lev['w']
            HP8, K8 = lev['HP8'], lev['K8']
            hb = highs[0].astype(f32)                      # (3, 3, h, w)
            lh, hl, hh = hb[:, 0], hb[:, 1], hb[:, 2]
            if lev['first']:
                top_even = yl[0].astype(f32)[:, :h, :w]    # Yl cropped to coarsest band
            else:
                top_even = jnp.zeros((3, h, w), f32)       # ll slots filled in-kernel
            top = _spread_pair(top_even, hl)               # (h, 6w)
            bot = _spread_pair(lh, hh)                     # (h, 6w)
            block = jnp.concatenate(
                [jnp.pad(top, ((0, HP8 - h), (0, 0))),
                 jnp.pad(bot, ((0, K8 - HP8 - h), (0, 0)))], axis=0)   # (K8, 6w)
            blocks.append(jnp.pad(block, ((0, 0), (0, PW_d - 6 * w))))
        return jnp.concatenate(blocks, axis=0)             # (sum K8, PW_d)
    return pack


# ----------------------------------------------------------------------------
# The fused Pallas kernel (built per static shape plan).
# ----------------------------------------------------------------------------
def _make_kernel(levels, epi):
    f32 = jnp.float32

    def kernel(dpool_ref, cpool_ref, out_ref):
        ll = None                                # (HP8_next, 6*w_next) spread layout
        for lev in levels:                       # static unroll, coarsest first
            h, w = lev['h'], lev['w']
            HP8, K8, HO8 = lev['HP8'], lev['K8'], lev['HO8']
            w2, oc = 2 * w, lev['out_cols']
            d0, g0, r0 = lev['d_off'], lev['g_off'], lev['r_off']

            S0 = dpool_ref[d0:d0 + K8, :6 * w]           # packed Yl/HL/LH/HH block
            G = cpool_ref[g0:g0 + HO8, :K8]              # [G0cT | 0 | G1cT]
            if lev['first']:
                S = S0
            else:
                # inject the carried ll into its zeroed slots; its row crop is
                # folded into G's zero columns [h, HP8).
                S = jnp.concatenate([S0[:HP8, :] + ll, S0[HP8:, :]], axis=0)
            # column synthesis for all channels and both (lo|hi) halves: ONE dot
            CH = jnp.dot(G, S, preferred_element_type=f32)           # (HO8, 6w)
            # row synthesis: restack channels onto sublanes -> ONE dot
            CH3 = jnp.concatenate(
                [CH[:, 0:w2], CH[:, w2:2 * w2], CH[:, 2 * w2:3 * w2]], axis=0)
            R = cpool_ref[r0:r0 + w2, :oc]                            # [Gr0; Gr1]
            Y3 = jnp.dot(CH3, R, preferred_element_type=f32)          # (3*HO8, oc)
            ll = jnp.concatenate(
                [Y3[0:HO8, :], Y3[HO8:2 * HO8, :], Y3[2 * HO8:3 * HO8, :]], axis=1)

        # Epilogue: clamp((img+1)/2) (0.5 folded into last level) -> bilinear down
        # -> nearest up, both as matmuls with lane-dense output.
        H8, W0 = epi['HO8_last'], epi['W0']
        height, width = epi['height'], epi['width']
        x = jnp.clip(ll + 0.5, 0.0, 1.0)                              # (H8, 3*W0)
        Mh = cpool_ref[epi['mh_off']:epi['mh_off'] + height, :H8]     # zero cols kill pad rows
        y = jnp.dot(Mh, x, preferred_element_type=f32)                # (height, 3*W0)
        y3 = jnp.concatenate([y[:, 0:W0], y[:, W0:2 * W0], y[:, 2 * W0:3 * W0]], axis=0)
        Mw = cpool_ref[epi['mw_off']:epi['mw_off'] + W0, :width]
        o3 = jnp.dot(y3, Mw, preferred_element_type=f32)              # (3*height, width)
        outs = [o3[0:height, :], o3[height:2 * height, :], o3[2 * height:3 * height, :]]
        if epi['pad_w'] > 0:
            outs.append(jnp.zeros((height, epi['pad_w']), f32))
        out_ref[...] = jnp.concatenate(outs, axis=1)                  # (height, OUT_W)

    return kernel


# ----------------------------------------------------------------------------
# Runner construction (cached per static shape plan) + public wrapper.
# ----------------------------------------------------------------------------
def _build_runner(yl_hw, yh_hw, dh, dw, width, height):
    levels, H0, W0 = _build_levels(yl_hw, yh_hw)

    # data pool layout
    PW_d = _round_up(max(6 * lev['w'] for lev in levels), 128)
    off = 0
    for lev in levels:
        lev['d_off'] = off
        off += lev['K8']
    dpool_rows = off

    # constant pool (baked into the jitted executable)
    Mh, MwT = _resample_mats(H0, W0, dh, dw, height, width)
    mats = []
    for lev in levels:
        Gfull, R = _level_mats(lev)
        lev['_gi'] = len(mats); mats.append(Gfull)
        lev['_ri'] = len(mats); mats.append(R)
    mats.append(Mh)
    mats.append(MwT)
    cpool_np, offs = _pack_const_pool(mats)
    for lev in levels:
        lev['g_off'] = offs[lev['_gi']]
        lev['r_off'] = offs[lev['_ri']]

    OUT_W = _round_up(3 * width, 128)
    epi = dict(mh_off=offs[-2], mw_off=offs[-1], height=height, width=width,
               W0=W0, HO8_last=levels[-1]['HO8'], pad_w=OUT_W - 3 * width)

    kernel = _make_kernel(levels, epi)
    pack_data = _make_data_packer(levels, PW_d)

    # VMEM budget: grid-less whole-array residency of both pools + output;
    # capped well below the physical per-core VMEM (64 MiB on v7x).
    need = 4 * (dpool_rows * PW_d + cpool_np.size + height * OUT_W) + (1 << 20)
    try:
        cap = int(pltpu.get_tpu_info().vmem_capacity_bytes)
    except Exception:
        cap = 64 * 2 ** 20
    vmem_limit = int(min(int(0.8 * cap), max(32 * 2 ** 20, 8 * need)))

    vmem_spec = pl.BlockSpec(memory_space=pltpu.MemorySpace.VMEM)
    call = pl.pallas_call(
        kernel,
        out_shape=jax.ShapeDtypeStruct((height, OUT_W), jnp.float32),
        in_specs=[vmem_spec, vmem_spec],
        out_specs=vmem_spec,
        compiler_params=pltpu.CompilerParams(vmem_limit_bytes=vmem_limit),
    )

    cpool_const = cpool_np

    @jax.jit
    def run(yl, yh):
        dpool = pack_data(yl, yh)
        out = call(dpool, jnp.asarray(cpool_const))
        # lane-dense kernel output (height, OUT_W) -> NCHW (layout plumbing only)
        img = out[:, :3 * width].reshape(height, 3, width).transpose(1, 0, 2)
        return img[None]

    return run


_RUNNERS = {}


def dwt_drawer_forward(Yl, Yh, *, cur_iteration, num_rows, num_cols, num_step,
                       width, height, plan=(600, 1000, 1400)):
    yl_hw = tuple(int(s) for s in Yl.shape[-2:])
    yh_hw = tuple(tuple(int(s) for s in h.shape[-2:]) for h in Yh)
    dh, dw = _choose_down_size(num_rows, num_cols, num_step, cur_iteration, plan)
    key = (yl_hw, yh_hw, dh, dw, int(width), int(height))
    if key not in _RUNNERS:
        _RUNNERS[key] = _build_runner(yl_hw, yh_hw, dh, dw, int(width), int(height))
    return _RUNNERS[key](Yl, tuple(Yh))


# ----------------------------------------------------------------------------
# Pure-JAX reference (independent per-channel formulation) for correctness.
# ----------------------------------------------------------------------------
def _forward_ref(Yl, Yh, *, cur_iteration, num_rows, num_cols, num_step,
                 width, height, plan=(600, 1000, 1400)):
    ll = Yl
    for highs in reversed(Yh):
        if ll.shape[-2] > highs.shape[-2]:
            ll = ll[..., :-1, :]
        if ll.shape[-1] > highs.shape[-1]:
            ll = ll[..., :-1]
        h, w = ll.shape[-2], ll.shape[-1]
        GcT0 = jnp.asarray(_synth_matrix(_COIF2_REC_LO, h).T)
        GcT1 = jnp.asarray(_synth_matrix(_COIF2_REC_HI, h).T)
        Gr0 = jnp.asarray(_synth_matrix(_COIF2_REC_LO, w))
        Gr1 = jnp.asarray(_synth_matrix(_COIF2_REC_HI, w))
        lh, hl, hhb = highs[:, :, 0], highs[:, :, 1], highs[:, :, 2]
        lo = (jnp.einsum('mh,bchw->bcmw', GcT0, ll)
              + jnp.einsum('mh,bchw->bcmw', GcT1, lh))
        hi = (jnp.einsum('mh,bchw->bcmw', GcT0, hl)
              + jnp.einsum('mh,bchw->bcmw', GcT1, hhb))
        ll = (jnp.einsum('bcmw,wn->bcmn', lo, Gr0)
              + jnp.einsum('bcmw,wn->bcmn', hi, Gr1))
    H0, W0 = ll.shape[-2], ll.shape[-1]
    dh, dw = _choose_down_size(num_rows, num_cols, num_step, cur_iteration, plan)
    Mh, MwT = _resample_mats(H0, W0, dh, dw, height, width)
    x = jnp.clip((ll + 1.0) * 0.5, 0.0, 1.0)
    y = jnp.einsum('Hh,bchw->bcHw', jnp.asarray(Mh), x)
    return jnp.einsum('bchw,wW->bchW', y, jnp.asarray(MwT))


def _forward_coeff_sizes(n, J, L):
    sizes, cur = [], n
    for _ in range(J):
        cur = (cur + L - 1) // 2      # pywt.dwt_coeff_len, mode='symmetric'
        sizes.append(cur)
    return sizes


if __name__ == "__main__":
    # Small config: shape=(4, 4, 3) -> internal canvas 32x32, output 16x16.
    num_rows, num_cols, num_step = 4, 4, 3
    width = height = 16
    J = 8
    fac = 2 ** num_step
    H0, W0 = num_rows * fac, num_cols * fac
    sizes_h = _forward_coeff_sizes(H0, J, _FILT_LEN)
    sizes_w = _forward_coeff_sizes(W0, J, _FILT_LEN)

    key = jax.random.PRNGKey(0)
    keys = jax.random.split(key, J + 1)
    # Module init would be Yl = 0.1*randn, Yh = zeros (DWT of zero int_img);
    # small random Yh is used here so the high-band kernel path is exercised
    # (the forward is generic over the trained coefficients anyway).
    Yl = 0.1 * jax.random.normal(keys[0], (1, 3, sizes_h[-1], sizes_w[-1]),
                                 dtype=jnp.float32)
    Yh = [0.01 * jax.random.normal(keys[j + 1],
                                   (1, 3, 3, sizes_h[j], sizes_w[j]),
                                   dtype=jnp.float32)
          for j in range(J)]

    cfg = dict(cur_iteration=1, num_rows=num_rows, num_cols=num_cols,
               num_step=num_step, width=width, height=height)

    out = jax.block_until_ready(dwt_drawer_forward(Yl, Yh, **cfg))
    assert out.shape == (1, 3, height, width), out.shape

    ref = jax.block_until_ready(_forward_ref(Yl, Yh, **cfg))
    if not np.allclose(np.asarray(out), np.asarray(ref), rtol=1e-3, atol=1e-4):
        raise AssertionError("Pallas kernel output does not match reference")

    print("KERNEL_OK")
</pallas_src>

<mosaic_0001>
module attributes {stable_mosaic.version = 11 : i64} {
  func.func @kernel(%arg0: memref<272x128xf32, #tpu.memory_space<vmem>>, %arg1: memref<432x128xf32, #tpu.memory_space<vmem>>, %arg2: memref<16x128xf32, #tpu.memory_space<vmem>>) attributes {dimension_semantics = [], scalar_prefetch = 0 : i64, scratch_operands = 0 : i64, tpu.core_type = #tpu.core_type<tc>} {
    %c0 = arith.constant 0 : index
    %c0_0 = arith.constant 0 : index
    %0 = vector.load %arg0[%c0, %c0_0] : memref<272x128xf32, #tpu.memory_space<vmem>>, vector<32x66xf32>
    %c0_1 = arith.constant 0 : index
    %c0_2 = arith.constant 0 : index
    %1 = vector.load %arg1[%c0_1, %c0_2] : memref<432x128xf32, #tpu.memory_space<vmem>>, vector<16x32xf32>
    %cst = arith.constant dense<0.000000e+00> : vector<16x66xf32>
    %2 = tpu.matmul %1, %0, %cst {dimension_numbers = #tpu.dot_dimension_numbers<[1], [0], [0], [1], [0, 0, 1, 1], [], []>} : vector<16x32xf32>, vector<32x66xf32>, vector<16x66xf32> -> vector<16x66xf32>
    %3 = vector.extract_strided_slice %2 {offsets = [0, 0], sizes = [16, 22], strides = [1, 1]} : vector<16x66xf32> to vector<16x22xf32>
    %4 = vector.extract_strided_slice %2 {offsets = [0, 22], sizes = [16, 22], strides = [1, 1]} : vector<16x66xf32> to vector<16x22xf32>
    %5 = vector.extract_strided_slice %2 {offsets = [0, 44], sizes = [16, 22], strides = [1, 1]} : vector<16x66xf32> to vector<16x22xf32>
    %6 = tpu.concatenate %3, %4, %5 in 0 : vector<16x22xf32>, vector<16x22xf32>, vector<16x22xf32> -> vector<48x22xf32>
    %c16 = arith.constant 16 : index
    %c0_3 = arith.constant 0 : index
    %7 = vector.load %arg1[%c16, %c0_3] : memref<432x128xf32, #tpu.memory_space<vmem>>, vector<22x22xf32>
    %cst_4 = arith.constant dense<0.000000e+00> : vector<48x22xf32>
    %8 = tpu.matmul %6, %7, %cst_4 {dimension_numbers = #tpu.dot_dimension_numbers<[1], [0], [0], [1], [0, 0, 1, 1], [], []>} : vector<48x22xf32>, vector<22x22xf32>, vector<48x22xf32> -> vector<48x22xf32>
    %9 = vector.extract_strided_slice %8 {offsets = [0, 0], sizes = [16, 22], strides = [1, 1]} : vector<48x22xf32> to vector<16x22xf32>
    %10 = vector.extract_strided_slice %8 {offsets = [16, 0], sizes = [16, 22], strides = [1, 1]} : vector<48x22xf32> to vector<16x22xf32>
    %11 = vector.extract_strided_slice %8 {offsets = [32, 0], sizes = [16, 22], strides = [1, 1]} : vector<48x22xf32> to vector<16x22xf32>
    %12 = tpu.concatenate %9, %10, %11 in 1 : vector<16x22xf32>, vector<16x22xf32>, vector<16x22xf32> -> vector<16x66xf32>
    %c32 = arith.constant 32 : index
    %c0_5 = arith.constant 0 : index
    %13 = vector.load %arg0[%c32, %c0_5] : memref<272x128xf32, #tpu.memory_space<vmem>>, vector<32x66xf32>
    %c40 = arith.constant 40 : index
    %c0_6 = arith.constant 0 : index
    %14 = vector.load %arg1[%c40, %c0_6] : memref<432x128xf32, #tpu.memory_space<vmem>>, vector<16x32xf32>
    %15 = vector.extract_strided_slice %13 {offsets = [0, 0], sizes = [16, 66], strides = [1, 1]} : vector<32x66xf32> to vector<16x66xf32>
    %16 = arith.addf %15, %12 : vector<16x66xf32>
    %17 = vector.extract_strided_slice %13 {offsets = [16, 0], sizes = [16, 66], strides = [1, 1]} : vector<32x66xf32> to vector<16x66xf32>
    %18 = tpu.concatenate %16, %17 in 0 : vector<16x66xf32>, vector<16x66xf32> -> vector<32x66xf32>
    %cst_7 = arith.constant dense<0.000000e+00> : vector<16x66xf32>
    %19 = tpu.matmul %14, %18, %cst_7 {dimension_numbers = #tpu.dot_dimension_numbers<[1], [0], [0], [1], [0, 0, 1, 1], [], []>} : vector<16x32xf32>, vector<32x66xf32>, vector<16x66xf32> -> vector<16x66xf32>
    %20 = vector.extract_strided_slice %19 {offsets = [0, 0], sizes = [16, 22], strides = [1, 1]} : vector<16x66xf32> to vector<16x22xf32>
    %21 = vector.extract_strided_slice %19 {offsets = [0, 22], sizes = [16, 22], strides = [1, 1]} : vector<16x66xf32> to vector<16x22xf32>
    %22 = vector.extract_strided_slice %19 {offsets = [0, 44], sizes = [16, 22], strides = [1, 1]} : vector<16x66xf32> to vector<16x22xf32>
    %23 = tpu.concatenate %20, %21, %22 in 0 : vector<16x22xf32>, vector<16x22xf32>, vector<16x22xf32> -> vector<48x22xf32>
    %c56 = arith.constant 56 : index
    %c0_8 = arith.constant 0 : index
    %24 = vector.load %arg1[%c56, %c0_8] : memref<432x128xf32, #tpu.memory_space<vmem>>, vector<22x22xf32>
    %cst_9 = arith.constant dense<0.000000e+00> : vector<48x22xf32>
    %25 = tpu.matmul %23, %24, %cst_9 {dimension_numbers = #tpu.dot_dimension_numbers<[1], [0], [0], [1], [0, 0, 1, 1], [], []>} : vector<48x22xf32>, vector<22x22xf32>, vector<48x22xf32> -> vector<48x22xf32>
    %26 = vector.extract_strided_slice %25 {offsets = [0, 0], sizes = [16, 22], strides = [1, 1]} : vector<48x22xf32> to vector<16x22xf32>
    %27 = vector.extract_strided_slice %25 {offsets = [16, 0], sizes = [16, 22], strides = [1, 1]} : vector<48x22xf32> to vector<16x22xf32>
    %28 = vector.extract_strided_slice %25 {offsets = [32, 0], sizes = [16, 22], strides = [1, 1]} : vector<48x22xf32> to vector<16x22xf32>
    %29 = tpu.concatenate %26, %27, %28 in 1 : vector<16x22xf32>, vector<16x22xf32>, vector<16x22xf32> -> vector<16x66xf32>
    %c64 = arith.constant 64 : index
    %c0_10 = arith.constant 0 : index
    %30 = vector.load %arg0[%c64, %c0_10] : memref<272x128xf32, #tpu.memory_space<vmem>>, vector<32x66xf32>
    %c80 = arith.constant 80 : index
    %c0_11 = arith.constant 0 : index
    %31 = vector.load %arg1[%c80, %c0_11] : memref<432x128xf32, #tpu.memory_space<vmem>>, vector<16x32xf32>
    %32 = vector.extract_strided_slice %30 {offsets = [0, 0], sizes = [16, 66], strides = [1, 1]} : vector<32x66xf32> to vector<16x66xf32>
    %33 = arith.addf %32, %29 : vector<16x66xf32>
    %34 = vector.extract_strided_slice %30 {offsets = [16, 0], sizes = [16, 66], strides = [1, 1]} : vector<32x66xf32> to vector<16x66xf32>
    %35 = tpu.concatenate %33, %34 in 0 : vector<16x66xf32>, vector<16x66xf32> -> vector<32x66xf32>
    %cst_12 = arith.constant dense<0.000000e+00> : vector<16x66xf32>
    %36 = tpu.matmul %31, %35, %cst_12 {dimension_numbers = #tpu.dot_dimension_numbers<[1], [0], [0], [1], [0, 0, 1, 1], [], []>} : vector<16x32xf32>, vector<32x66xf32>, vector<16x66xf32> -> vector<16x66xf32>
    %37 = vector.extract_strided_slice %36 {offsets = [0, 0], sizes = [16, 22], strides = [1, 1]} : vector<16x66xf32> to vector<16x22xf32>
    %38 = vector.extract_strided_slice %36 {offsets = [0, 22], sizes = [16, 22], strides = [1, 1]} : vector<16x66xf32> to vector<16x22xf32>
    %39 = vector.extract_strided_slice %36 {offsets = [0, 44], sizes = [16, 22], strides = [1, 1]} : vector<16x66xf32> to vector<16x22xf32>
    %40 = tpu.concatenate %37, %38, %39 in 0 : vector<16x22xf32>, vector<16x22xf32>, vector<16x22xf32> -> vector<48x22xf32>
    %c96 = arith.constant 96 : index
    %c0_13 = arith.constant 0 : index
    %41 = vector.load %arg1[%c96, %c0_13] : memref<432x128xf32, #tpu.memory_space<vmem>>, vector<22x22xf32>
    %cst_14 = arith.constant dense<0.000000e+00> : vector<48x22xf32>
    %42 = tpu.matmul %40, %41, %cst_14 {dimension_numbers = #tpu.dot_dimension_numbers<[1], [0], [0], [1], [0, 0, 1, 1], [], []>} : vector<48x22xf32>, vector<22x22xf32>, vector<48x22xf32> -> vector<48x22xf32>
    %43 = vector.extract_strided_slice %42 {offsets = [0, 0], sizes = [16, 22], strides = [1, 1]} : vector<48x22xf32> to vector<16x22xf32>
    %44 = vector.extract_strided_slice %42 {offsets = [16, 0], sizes = [16, 22], strides = [1, 1]} : vector<48x22xf32> to vector<16x22xf32>
    %45 = vector.extract_strided_slice %42 {offsets = [32, 0], sizes = [16, 22], strides = [1, 1]} : vector<48x22xf32> to vector<16x22xf32>
    %46 = tpu.concatenate %43, %44, %45 in 1 : vector<16x22xf32>, vector<16x22xf32>, vector<16x22xf32> -> vector<16x66xf32>
    %c96_15 = arith.constant 96 : index
    %c0_16 = arith.constant 0 : index
    %47 = vector.load %arg0[%c96_15, %c0_16] : memref<272x128xf32, #tpu.memory_space<vmem>>, vector<32x66xf32>
    %c120 = arith.constant 120 : index
    %c0_17 = arith.constant 0 : index
    %48 = vector.load %arg1[%c120, %c0_17] : memref<432x128xf32, #tpu.memory_space<vmem>>, vector<16x32xf32>
    %49 = vector.extract_strided_slice %47 {offsets = [0, 0], sizes = [16, 66], strides = [1, 1]} : vector<32x66xf32> to vector<16x66xf32>
    %50 = arith.addf %49, %46 : vector<16x66xf32>
    %51 = vector.extract_strided_slice %47 {offsets = [16, 0], sizes = [16, 66], strides = [1, 1]} : vector<32x66xf32> to vector<16x66xf32>
    %52 = tpu.concatenate %50, %51 in 0 : vector<16x66xf32>, vector<16x66xf32> -> vector<32x66xf32>
    %cst_18 = arith.constant dense<0.000000e+00> : vector<16x66xf32>
    %53 = tpu.matmul %48, %52, %cst_18 {dimension_numbers = #tpu.dot_dimension_numbers<[1], [0], [0], [1], [0, 0, 1, 1], [], []>} : vector<16x32xf32>, vector<32x66xf32>, vector<16x66xf32> -> vector<16x66xf32>
    %54 = vector.extract_strided_slice %53 {offsets = [0, 0], sizes = [16, 22], strides = [1, 1]} : vector<16x66xf32> to vector<16x22xf32>
    %55 = vector.extract_strided_slice %53 {offsets = [0, 22], sizes = [16, 22], strides = [1, 1]} : vector<16x66xf32> to vector<16x22xf32>
    %56 = vector.extract_strided_slice %53 {offsets = [0, 44], sizes = [16, 22], strides = [1, 1]} : vector<16x66xf32> to vector<16x22xf32>
    %57 = tpu.concatenate %54, %55, %56 in 0 : vector<16x22xf32>, vector<16x22xf32>, vector<16x22xf32> -> vector<48x22xf32>
    %c136 = arith.constant 136 : index
    %c0_19 = arith.constant 0 : index
    %58 = vector.load %arg1[%c136, %c0_19] : memref<432x128xf32, #tpu.memory_space<vmem>>, vector<22x24xf32>
    %cst_20 = arith.constant dense<0.000000e+00> : vector<48x24xf32>
    %59 = tpu.matmul %57, %58, %cst_20 {dimension_numbers = #tpu.dot_dimension_numbers<[1], [0], [0], [1], [0, 0, 1, 1], [], []>} : vector<48x22xf32>, vector<22x24xf32>, vector<48x24xf32> -> vector<48x24xf32>
    %60 = vector.extract_strided_slice %59 {offsets = [0, 0], sizes = [16, 24], strides = [1, 1]} : vector<48x24xf32> to vector<16x24xf32>
    %61 = vector.extract_strided_slice %59 {offsets = [16, 0], sizes = [16, 24], strides = [1, 1]} : vector<48x24xf32> to vector<16x24xf32>
    %62 = vector.extract_strided_slice %59 {offsets = [32, 0], sizes = [16, 24], strides = [1, 1]} : vector<48x24xf32> to vector<16x24xf32>
    %63 = tpu.concatenate %60, %61, %62 in 1 : vector<16x24xf32>, vector<16x24xf32>, vector<16x24xf32> -> vector<16x72xf32>
    %c128 = arith.constant 128 : index
    %c0_21 = arith.constant 0 : index
    %64 = vector.load %arg0[%c128, %c0_21] : memref<272x128xf32, #tpu.memory_space<vmem>>, vector<32x72xf32>
    %c160 = arith.constant 160 : index
    %c0_22 = arith.constant 0 : index
    %65 = vector.load %arg1[%c160, %c0_22] : memref<432x128xf32, #tpu.memory_space<vmem>>, vector<16x32xf32>
    %66 = vector.extract_strided_slice %64 {offsets = [0, 0], sizes = [16, 72], strides = [1, 1]} : vector<32x72xf32> to vector<16x72xf32>
    %67 = arith.addf %66, %63 : vector<16x72xf32>
    %68 = vector.extract_strided_slice %64 {offsets = [16, 0], sizes = [16, 72], strides = [1, 1]} : vector<32x72xf32> to vector<16x72xf32>
    %69 = tpu.concatenate %67, %68 in 0 : vector<16x72xf32>, vector<16x72xf32> -> vector<32x72xf32>
    %cst_23 = arith.constant dense<0.000000e+00> : vector<16x72xf32>
    %70 = tpu.matmul %65, %69, %cst_23 {dimension_numbers = #tpu.dot_dimension_numbers<[1], [0], [0], [1], [0, 0, 1, 1], [], []>} : vector<16x32xf32>, vector<32x72xf32>, vector<16x72xf32> -> vector<16x72xf32>
    %71 = vector.extract_strided_slice %70 {offsets = [0, 0], sizes = [16, 24], strides = [1, 1]} : vector<16x72xf32> to vector<16x24xf32>
    %72 = vector.extract_strided_slice %70 {offsets = [0, 24], sizes = [16, 24], strides = [1, 1]} : vector<16x72xf32> to vector<16x24xf32>
    %73 = vector.extract_strided_slice %70 {offsets = [0, 48], sizes = [16, 24], strides = [1, 1]} : vector<16x72xf32> to vector<16x24xf32>
    %74 = tpu.concatenate %71, %72, %73 in 0 : vector<16x24xf32>, vector<16x24xf32>, vector<16x24xf32> -> vector<48x24xf32>
    %c176 = arith.constant 176 : index
    %c0_24 = arith.constant 0 : index
    %75 = vector.load %arg1[%c176, %c0_24] : memref<432x128xf32, #tpu.memory_space<vmem>>, vector<24x26xf32>
    %cst_25 = arith.constant dense<0.000000e+00> : vector<48x26xf32>
    %76 = tpu.matmul %74, %75, %cst_25 {dimension_numbers = #tpu.dot_dimension_numbers<[1], [0], [0], [1], [0, 0, 1, 1], [], []>} : vector<48x24xf32>, vector<24x26xf32>, vector<48x26xf32> -> vector<48x26xf32>
    %77 = vector.extract_strided_slice %76 {offsets = [0, 0], sizes = [16, 26], strides = [1, 1]} : vector<48x26xf32> to vector<16x26xf32>
    %78 = vector.extract_strided_slice %76 {offsets = [16, 0], sizes = [16, 26], strides = [1, 1]} : vector<48x26xf32> to vector<16x26xf32>
    %79 = vector.extract_strided_slice %76 {offsets = [32, 0], sizes = [16, 26], strides = [1, 1]} : vector<48x26xf32> to vector<16x26xf32>
    %80 = tpu.concatenate %77, %78, %79 in 1 : vector<16x26xf32>, vector<16x26xf32>, vector<16x26xf32> -> vector<16x78xf32>
    %c160_26 = arith.constant 160 : index
    %c0_27 = arith.constant 0 : index
    %81 = vector.load %arg0[%c160_26, %c0_27] : memref<272x128xf32, #tpu.memory_space<vmem>>, vector<32x78xf32>
    %c200 = arith.constant 200 : index
    %c0_28 = arith.constant 0 : index
    %82 = vector.load %arg1[%c200, %c0_28] : memref<432x128xf32, #tpu.memory_space<vmem>>, vector<16x32xf32>
    %83 = vector.extract_strided_slice %81 {offsets = [0, 0], sizes = [16, 78], strides = [1, 1]} : vector<32x78xf32> to vector<16x78xf32>
    %84 = arith.addf %83, %80 : vector<16x78xf32>
    %85 = vector.extract_strided_slice %81 {offsets = [16, 0], sizes = [16, 78], strides = [1, 1]} : vector<32x78xf32> to vector<16x78xf32>
    %86 = tpu.concatenate %84, %85 in 0 : vector<16x78xf32>, vector<16x78xf32> -> vector<32x78xf32>
    %cst_29 = arith.constant dense<0.000000e+00> : vector<16x78xf32>
    %87 = tpu.matmul %82, %86, %cst_29 {dimension_numbers = #tpu.dot_dimension_numbers<[1], [0], [0], [1], [0, 0, 1, 1], [], []>} : vector<16x32xf32>, vector<32x78xf32>, vector<16x78xf32> -> vector<16x78xf32>
    %88 = vector.extract_strided_slice %87 {offsets = [0, 0], sizes = [16, 26], strides = [1, 1]} : vector<16x78xf32> to vector<16x26xf32>
    %89 = vector.extract_strided_slice %87 {offsets = [0, 26], sizes = [16, 26], strides = [1, 1]} : vector<16x78xf32> to vector<16x26xf32>
    %90 = vector.extract_strided_slice %87 {offsets = [0, 52], sizes = [16, 26], strides = [1, 1]} : vector<16x78xf32> to vector<16x26xf32>
    %91 = tpu.concatenate %88, %89, %90 in 0 : vector<16x26xf32>, vector<16x26xf32>, vector<16x26xf32> -> vector<48x26xf32>
    %c216 = arith.constant 216 : index
    %c0_30 = arith.constant 0 : index
    %92 = vector.load %arg1[%c216, %c0_30] : memref<432x128xf32, #tpu.memory_space<vmem>>, vector<26x32xf32>
    %cst_31 = arith.constant dense<0.000000e+00> : vector<48x32xf32>
    %93 = tpu.matmul %91, %92, %cst_31 {dimension_numbers = #tpu.dot_dimension_numbers<[1], [0], [0], [1], [0, 0, 1, 1], [], []>} : vector<48x26xf32>, vector<26x32xf32>, vector<48x32xf32> -> vector<48x32xf32>
    %94 = vector.extract_strided_slice %93 {offsets = [0, 0], sizes = [16, 32], strides = [1, 1]} : vector<48x32xf32> to vector<16x32xf32>
    %95 = vector.extract_strided_slice %93 {offsets = [16, 0], sizes = [16, 32], strides = [1, 1]} : vector<48x32xf32> to vector<16x32xf32>
    %96 = vector.extract_strided_slice %93 {offsets = [32, 0], sizes = [16, 32], strides = [1, 1]} : vector<48x32xf32> to vector<16x32xf32>
    %97 = tpu.concatenate %94, %95, %96 in 1 : vector<16x32xf32>, vector<16x32xf32>, vector<16x32xf32> -> vector<16x96xf32>
    %c192 = arith.constant 192 : index
    %c0_32 = arith.constant 0 : index
    %98 = vector.load %arg0[%c192, %c0_32] : memref<272x128xf32, #tpu.memory_space<vmem>>, vector<32x96xf32>
    %c248 = arith.constant 248 : index
    %c0_33 = arith.constant 0 : index
    %99 = vector.load %arg1[%c248, %c0_33] : memref<432x128xf32, #tpu.memory_space<vmem>>, vector<24x32xf32>
    %100 = vector.extract_strided_slice %98 {offsets = [0, 0], sizes = [16, 96], strides = [1, 1]} : vector<32x96xf32> to vector<16x96xf32>
    %101 = arith.addf %100, %97 : vector<16x96xf32>
    %102 = vector.extract_strided_slice %98 {offsets = [16, 0], sizes = [16, 96], strides = [1, 1]} : vector<32x96xf32> to vector<16x96xf32>
    %103 = tpu.concatenate %101, %102 in 0 : vector<16x96xf32>, vector<16x96xf32> -> vector<32x96xf32>
    %cst_34 = arith.constant dense<0.000000e+00> : vector<24x96xf32>
    %104 = tpu.matmul %99, %103, %cst_34 {dimension_numbers = #tpu.dot_dimension_numbers<[1], [0], [0], [1], [0, 0, 1, 1], [], []>} : vector<24x32xf32>, vector<32x96xf32>, vector<24x96xf32> -> vector<24x96xf32>
    %105 = vector.extract_strided_slice %104 {offsets = [0, 0], sizes = [24, 32], strides = [1, 1]} : vector<24x96xf32> to vector<24x32xf32>
    %106 = vector.extract_strided_slice %104 {offsets = [0, 32], sizes = [24, 32], strides = [1, 1]} : vector<24x96xf32> to vector<24x32xf32>
    %107 = vector.extract_strided_slice %104 {offsets = [0, 64], sizes = [24, 32], strides = [1, 1]} : vector<24x96xf32> to vector<24x32xf32>
    %108 = tpu.concatenate %105, %106, %107 in 0 : vector<24x32xf32>, vector<24x32xf32>, vector<24x32xf32> -> vector<72x32xf32>
    %c272 = arith.constant 272 : index
    %c0_35 = arith.constant 0 : index
    %109 = vector.load %arg1[%c272, %c0_35] : memref<432x128xf32, #tpu.memory_space<vmem>>, vector<32x42xf32>
    %cst_36 = arith.constant dense<0.000000e+00> : vector<72x42xf32>
    %110 = tpu.matmul %108, %109, %cst_36 {dimension_numbers = #tpu.dot_dimension_numbers<[1], [0], [0], [1], [0, 0, 1, 1], [], []>} : vector<72x32xf32>, vector<32x42xf32>, vector<72x42xf32> -> vector<72x42xf32>
    %111 = vector.extract_strided_slice %110 {offsets = [0, 0], sizes = [24, 42], strides = [1, 1]} : vector<72x42xf32> to vector<24x42xf32>
    %112 = vector.extract_strided_slice %110 {offsets = [24, 0], sizes = [24, 42], strides = [1, 1]} : vector<72x42xf32> to vector<24x42xf32>
    %113 = vector.extract_strided_slice %110 {offsets = [48, 0], sizes = [24, 42], strides = [1, 1]} : vector<72x42xf32> to vector<24x42xf32>
    %114 = tpu.concatenate %111, %112, %113 in 1 : vector<24x42xf32>, vector<24x42xf32>, vector<24x42xf32> -> vector<24x126xf32>
    %c224 = arith.constant 224 : index
    %c0_37 = arith.constant 0 : index
    %115 = vector.load %arg0[%c224, %c0_37] : memref<272x128xf32, #tpu.memory_space<vmem>>, vector<48x126xf32>
    %c304 = arith.constant 304 : index
    %c0_38 = arith.constant 0 : index
    %116 = vector.load %arg1[%c304, %c0_38] : memref<432x128xf32, #tpu.memory_space<vmem>>, vector<32x48xf32>
    %117 = vector.extract_strided_slice %115 {offsets = [0, 0], sizes = [24, 126], strides = [1, 1]} : vector<48x126xf32> to vector<24x126xf32>
    %118 = arith.addf %117, %114 : vector<24x126xf32>
    %119 = vector.extract_strided_slice %115 {offsets = [24, 0], sizes = [24, 126], strides = [1, 1]} : vector<48x126xf32> to vector<24x126xf32>
    %120 = tpu.concatenate %118, %119 in 0 : vector<24x126xf32>, vector<24x126xf32> -> vector<48x126xf32>
    %cst_39 = arith.constant dense<0.000000e+00> : vector<32x126xf32>
    %121 = tpu.matmul %116, %120, %cst_39 {dimension_numbers = #tpu.dot_dimension_numbers<[1], [0], [0], [1], [0, 0, 1, 1], [], []>} : vector<32x48xf32>, vector<48x126xf32>, vector<32x126xf32> -> vector<32x126xf32>
    %122 = vector.extract_strided_slice %121 {offsets = [0, 0], sizes = [32, 42], strides = [1, 1]} : vector<32x126xf32> to vector<32x42xf32>
    %123 = vector.extract_strided_slice %121 {offsets = [0, 42], sizes = [32, 42], strides = [1, 1]} : vector<32x126xf32> to vector<32x42xf32>
    %124 = vector.extract_strided_slice %121 {offsets = [0, 84], sizes = [32, 42], strides = [1, 1]} : vector<32x126xf32> to vector<32x42xf32>
    %125 = tpu.concatenate %122, %123, %124 in 0 : vector<32x42xf32>, vector<32x42xf32>, vector<32x42xf32> -> vector<96x42xf32>
    %c336 = arith.constant 336 : index
    %c0_40 = arith.constant 0 : index
    %126 = vector.load %arg1[%c336, %c0_40] : memref<432x128xf32, #tpu.memory_space<vmem>>, vector<42x32xf32>
    %cst_41 = arith.constant dense<0.000000e+00> : vector<96x32xf32>
    %127 = tpu.matmul %125, %126, %cst_41 {dimension_numbers = #tpu.dot_dimension_numbers<[1], [0], [0], [1], [0, 0, 1, 1], [], []>} : vector<96x42xf32>, vector<42x32xf32>, vector<96x32xf32> -> vector<96x32xf32>
    %128 = vector.extract_strided_slice %127 {offsets = [0, 0], sizes = [32, 32], strides = [1, 1]} : vector<96x32xf32> to vector<32x32xf32>
    %129 = vector.extract_strided_slice %127 {offsets = [32, 0], sizes = [32, 32], strides = [1, 1]} : vector<96x32xf32> to vector<32x32xf32>
    %130 = vector.extract_strided_slice %127 {offsets = [64, 0], sizes = [32, 32], strides = [1, 1]} : vector<96x32xf32> to vector<32x32xf32>
    %131 = tpu.concatenate %128, %129, %130 in 1 : vector<32x32xf32>, vector<32x32xf32>, vector<32x32xf32> -> vector<32x96xf32>
    %cst_42 = arith.constant 5.000000e-01 : f32
    %132 = vector.broadcast %cst_42 : f32 to vector<32x96xf32>
    %133 = arith.addf %131, %132 : vector<32x96xf32>
    %cst_43 = arith.constant 0.000000e+00 : f32
    %cst_44 = arith.constant 1.000000e+00 : f32
    %134 = vector.broadcast %cst_43 : f32 to vector<32x96xf32>
    %135 = arith.maximumf %134, %133 : vector<32x96xf32>
    %136 = vector.broadcast %cst_44 : f32 to vector<32x96xf32>
    %137 = arith.minimumf %136, %135 : vector<32x96xf32>
    %c384 = arith.constant 384 : index
    %c0_45 = arith.constant 0 : index
    %138 = vector.load %arg1[%c384, %c0_45] : memref<432x128xf32, #tpu.memory_space<vmem>>, vector<16x32xf32>
    %cst_46 = arith.constant dense<0.000000e+00> : vector<16x96xf32>
    %139 = tpu.matmul %138, %137, %cst_46 {dimension_numbers = #tpu.dot_dimension_numbers<[1], [0], [0], [1], [0, 0, 1, 1], [], []>} : vector<16x32xf32>, vector<32x96xf32>, vector<16x96xf32> -> vector<16x96xf32>
    %140 = vector.extract_strided_slice %139 {offsets = [0, 0], sizes = [16, 32], strides = [1, 1]} : vector<16x96xf32> to vector<16x32xf32>
    %141 = vector.extract_strided_slice %139 {offsets = [0, 32], sizes = [16, 32], strides = [1, 1]} : vector<16x96xf32> to vector<16x32xf32>
    %142 = vector.extract_strided_slice %139 {offsets = [0, 64], sizes = [16, 32], strides = [1, 1]} : vector<16x96xf32> to vector<16x32xf32>
    %143 = tpu.concatenate %140, %141, %142 in 0 : vector<16x32xf32>, vector<16x32xf32>, vector<16x32xf32> -> vector<48x32xf32>
    %c400 = arith.constant 400 : index
    %c0_47 = arith.constant 0 : index
    %144 = vector.load %arg1[%c400, %c0_47] : memref<432x128xf32, #tpu.memory_space<vmem>>, vector<32x16xf32>
    %cst_48 = arith.constant dense<0.000000e+00> : vector<48x16xf32>
    %145 = tpu.matmul %143, %144, %cst_48 {dimension_numbers = #tpu.dot_dimension_numbers<[1], [0], [0], [1], [0, 0, 1, 1], [], []>} : vector<48x32xf32>, vector<32x16xf32>, vector<48x16xf32> -> vector<48x16xf32>
    %146 = vector.extract_strided_slice %145 {offsets = [0, 0], sizes = [16, 16], strides = [1, 1]} : vector<48x16xf32> to vector<16x16xf32>
    %147 = vector.extract_strided_slice %145 {offsets = [16, 0], sizes = [16, 16], strides = [1, 1]} : vector<48x16xf32> to vector<16x16xf32>
    %148 = vector.extract_strided_slice %145 {offsets = [32, 0], sizes = [16, 16], strides = [1, 1]} : vector<48x16xf32> to vector<16x16xf32>
    %cst_49 = arith.constant 0.000000e+00 : f32
    %149 = vector.broadcast %cst_49 : f32 to vector<16x80xf32>
    %150 = tpu.concatenate %146, %147, %148, %149 in 1 : vector<16x16xf32>, vector<16x16xf32>, vector<16x16xf32>, vector<16x80xf32> -> vector<16x128xf32>
    %c0_50 = arith.constant 0 : index
    %c0_51 = arith.constant 0 : index
    %151 = vector.load %arg2[%c0_50, %c0_51] : memref<16x128xf32, #tpu.memory_space<vmem>>, vector<16x128xf32>
    tpu.vector_store %arg2[%c0_50, %c0_51], %150 {strides = array<i32>} : memref<16x128xf32, #tpu.memory_space<vmem>>, vector<16x128xf32>,
    return
  }
}

</mosaic_0001>

<llo_original>
// kernel: run.1
$region0: #{run.1}
  #allocation0 [shape = 'u32[]', space=smem, size = 0x4, offset = 0x4, fixed_abs, tag = 'smem constant byte address 0x4 - core index']
  #allocation1 [shape = 'u32[144,128]{1,0:T(1,128)}', space=vmem, size = 0x12000, scoped, tag = 'internal scratch']
  %s0 = inlined_call_operand.vmem [shape: f32[272,128], index: 0, kind: input, shape index: {}]
  %s1 = inlined_call_operand.vmem [shape: f32[432,128], index: 1, kind: input, shape index: {}]
  %s2 = inlined_call_operand.vmem [shape: f32[16,128], index: 2, kind: output, shape index: {}]
  %s3 = sld [smem:[#allocation0]]
  $region18: #{run.1} parent=0
    _
  %s5 = ssub.s32 1, %s3
  %s6 = scalar_select 0, %s5, %s3
  // Predicated region
  $region2: #{run.1} parent=0 // pred_check
    _
  $region3: #{run.1} parent=0 // pred_check_branch
    %8 = sbr.rel (0) target = $region5
  $region4: #{run.1} parent=0 // pred_region
    _
  $region5: #{run.1} parent=0 // pred_fallthru
    _
  // Predicated region
  $region6: #{run.1} parent=0 // pred_check
    _
  $region7: #{run.1} parent=0 // pred_check_branch
    %10 = sbr.rel (0) target = $region9
  $region8: #{run.1} parent=0 // pred_region
    _
  $region9: #{run.1} parent=0 // pred_fallthru
    _
  %v11 = vld [vmem:[%s0] sm:$0xff]
  %v12 = vld [vmem:[%s0 + $0x8] sm:$0xff]
  %v13 = vld [vmem:[%s0 + $0x10] sm:$0xff]
  %v14 = vld [vmem:[%s0 + $0x18] sm:$0xff]
  %v15 = vld [vmem:[%s1] sm:$0xff]
  %v16 = vld [vmem:[%s1 + $0x8] sm:$0xff]
  %vm17 = vcmask 261120
  %v19 = vsel %vm17, %v15, 0
  %v22 = vsel %vm17, %v16, 0
  %24 = vmatprep.subr.mxu0 0.0
  %25 = vmatpush1.msra.mxu0 0.0
  %26 = vmatprep.subr.mxu0 0.0
  %27 = vmatpush1.msra.mxu0 0.0
  %28 = vmatprep.subr.mxu0 0.0
  %29 = vmatpush1.msra.mxu0 0.0
  %30 = vmatprep.subr.mxu0 0.0
  %31 = vmatpush1.msra.mxu0 0.0
  %32 = vmatprep.subr.mxu0 0.0
  %33 = vmatpush1.msra.mxu0 0.0
  %34 = vmatprep.subr.mxu0 0.0
  %35 = vmatpush1.msra.mxu0 0.0
  %36 = vmatprep.subr.mxu0 0.0
  %37 = vmatpush1.msra.mxu0 0.0
  %38 = vmatprep.subr.mxu0 0.0
  %39 = vmatpush1.msra.mxu0 0.0
  %40 = vmatprep.subr.mxu0 0.0
  %41 = vmatpush1.msra.mxu0 0.0
  %42 = vmatprep.subr.mxu0 0.0
  %43 = vmatpush1.msra.mxu0 0.0
  %44 = vmatprep.subr.mxu0 0.0
  %45 = vmatpush1.msra.mxu0 0.0
  %46 = vmatprep.subr.mxu0 0.0
  %47 = vmatpush1.msra.mxu0 0.0
  %48 = vmatprep.subr.mxu0 0.0
  %49 = vmatpush1.msra.mxu0 %v14
  %50 = vmatprep.subr.mxu0 0.0
  %51 = vmatpush1.msra.mxu0 %v13
  %52 = vmatprep.subr.mxu0 0.0
  %53 = vmatpush1.msra.mxu0 %v12
  %54 = vmatprep.subr.mxu0 0.0
  %55 = vmatpush1.msra.mxu0 %v11
  %56 = vmatprep.subr.mxu0 0.0
  %57 = vmatpush2.msra.mxu0 0.0
  %58 = vmatprep.subr.mxu0 0.0
  %59 = vmatpush2.msra.mxu0 0.0
  %60 = vmatprep.subr.mxu0 0.0
  %61 = vmatpush2.msra.mxu0 0.0
  %62 = vmatprep.subr.mxu0 0.0
  %63 = vmatpush2.msra.mxu0 0.0
  %64 = vmatprep.subr.mxu0 0.0
  %65 = vmatpush2.msra.mxu0 0.0
  %66 = vmatprep.subr.mxu0 0.0
  %67 = vmatpush2.msra.mxu0 0.0
  %68 = vmatprep.subr.mxu0 0.0
  %69 = vmatpush2.msra.mxu0 0.0
  %70 = vmatprep.subr.mxu0 0.0
  %71 = vmatpush2.msra.mxu0 0.0
  %72 = vmatprep.subr.mxu0 0.0
  %73 = vmatpush2.msra.mxu0 0.0
  %74 = vmatprep.subr.mxu0 0.0
  %75 = vmatpush2.msra.mxu0 0.0
  %76 = vmatprep.subr.mxu0 0.0
  %77 = vmatpush2.msra.mxu0 0.0
  %78 = vmatprep.subr.mxu0 0.0
  %79 = vmatpush2.msra.mxu0 0.0
  %80 = vmatprep.subr.mxu0 0.0
  %81 = vmatpush2.msra.mxu0 0.0
  %82 = vmatprep.subr.mxu0 0.0
  %83 = vmatpush2.msra.mxu0 0.0
  %84 = vmatprep.subr.mxu0 0.0
  %85 = vmatpush2.msra.mxu0 0.0
  %86 = vmatprep.subr.mxu0 0.0
  %87 = vmatpush2.msra.mxu0 0.0
  %88 = vmatprep.mubr.f32.mxu0 0.0
  %89 = vmatmul.mubr.f32.gmra.mxu0 %v19
  %v90 = vpop.f32.mrf.mxu0
  %v91 = vadd.f32 0.0, %v90
  %v92 = vpop.f32.mrf.mxu0
  %93 = vmatprep.mubr.f32.mxu0 0.0
  %94 = vmatmul.mubr.f32.gmra.mxu0 %v22
  %v95 = vpop.f32.mrf.mxu0
  %v96 = vadd.f32 0.0, %v95
  %v97 = vpop.f32.mrf.mxu0
  %98 = vdwg.mxu0
  %101 = vrot.lane.b32.xlu0 %v91, 106
  %v102 = vpop.permute.xlu0 %101
  %103 = vrot.lane.b32.xlu0 %v96, 106
  %v104 = vpop.permute.xlu0 %103
  %105 = vrot.lane.b32.xlu0 %v91, 84
  %v106 = vpop.permute.xlu0 %105
  %107 = vrot.lane.b32.xlu0 %v96, 84
  %v108 = vpop.permute.xlu0 %107
  %v109 = vld [vmem:[%s1 + $0x10] sm:$0xff]
  %v110 = vld [vmem:[%s1 + $0x18] sm:$0xff]
  %v111 = vld [vmem:[%s1 + $0x20] sm:$0x3f]
  %vm112 = vcmask 179200
  %v113 = vsel %vm112, %v91, 0
  %v115 = vsel %vm112, %v96, 0
  %v117 = vsel %vm112, %v102, 0
  %v119 = vsel %vm112, %v104, 0
  %v121 = vsel %vm112, %v106, 0
  %v123 = vsel %vm112, %v108, 0
  %vm125 = vcmask 1045504
  %v127 = vsel %vm125, %v111, 0
  %129 = vmatprep.subr.mxu0 0.0
  %130 = vmatpush1.msra.mxu0 0.0
  %131 = vmatprep.subr.mxu0 0.0
  %132 = vmatpush1.msra.mxu0 0.0
  %133 = vmatprep.subr.mxu0 0.0
  %134 = vmatpush1.msra.mxu0 0.0
  %135 = vmatprep.subr.mxu0 0.0
  %136 = vmatpush1.msra.mxu0 0.0
  %137 = vmatprep.subr.mxu0 0.0
  %138 = vmatpush1.msra.mxu0 0.0
  %139 = vmatprep.subr.mxu0 0.0
  %140 = vmatpush1.msra.mxu0 0.0
  %141 = vmatprep.subr.mxu0 0.0
  %142 = vmatpush1.msra.mxu0 0.0
  %143 = vmatprep.subr.mxu0 0.0
  %144 = vmatpush1.msra.mxu0 0.0
  %145 = vmatprep.subr.mxu0 0.0
  %146 = vmatpush1.msra.mxu0 0.0
  %147 = vmatprep.subr.mxu0 0.0
  %148 = vmatpush1.msra.mxu0 0.0
  %149 = vmatprep.subr.mxu0 0.0
  %150 = vmatpush1.msra.mxu0 0.0
  %151 = vmatprep.subr.mxu0 0.0
  %152 = vmatpush1.msra.mxu0 0.0
  %153 = vmatprep.subr.mxu0 0.0
  %154 = vmatpush1.msra.mxu0 0.0
  %155 = vmatprep.subr.mxu0 0.0
  %156 = vmatpush1.msra.mxu0 %v127
  %157 = vmatprep.subr.mxu0 0.0
  %158 = vmatpush1.msra.mxu0 %v110
  %159 = vmatprep.subr.mxu0 0.0
  %160 = vmatpush1.msra.mxu0 %v109
  %161 = vmatprep.subr.mxu0 0.0
  %162 = vmatpush2.msra.mxu0 0.0
  %163 = vmatprep.subr.mxu0 0.0
  %164 = vmatpush2.msra.mxu0 0.0
  %165 = vmatprep.subr.mxu0 0.0
  %166 = vmatpush2.msra.mxu0 0.0
  %167 = vmatprep.subr.mxu0 0.0
  %168 = vmatpush2.msra.mxu0 0.0
  %169 = vmatprep.subr.mxu0 0.0
  %170 = vmatpush2.msra.mxu0 0.0
  %171 = vmatprep.subr.mxu0 0.0
  %172 = vmatpush2.msra.mxu0 0.0
  %173 = vmatprep.subr.mxu0 0.0
  %174 = vmatpush2.msra.mxu0 0.0
  %175 = vmatprep.subr.mxu0 0.0
  %176 = vmatpush2.msra.mxu0 0.0
  %177 = vmatprep.subr.mxu0 0.0
  %178 = vmatpush2.msra.mxu0 0.0
  %179 = vmatprep.subr.mxu0 0.0
  %180 = vmatpush2.msra.mxu0 0.0
  %181 = vmatprep.subr.mxu0 0.0
  %182 = vmatpush2.msra.mxu0 0.0
  %183 = vmatprep.subr.mxu0 0.0
  %184 = vmatpush2.msra.mxu0 0.0
  %185 = vmatprep.subr.mxu0 0.0
  %186 = vmatpush2.msra.mxu0 0.0
  %187 = vmatprep.subr.mxu0 0.0
  %188 = vmatpush2.msra.mxu0 0.0
  %189 = vmatprep.subr.mxu0 0.0
  %190 = vmatpush2.msra.mxu0 0.0
  %191 = vmatprep.subr.mxu0 0.0
  %192 = vmatpush2.msra.mxu0 0.0
  %193 = vmatprep.mubr.f32.mxu0 0.0
  %194 = vmatmul.mubr.f32.gmra.mxu0 %v113
  %v195 = vpop.f32.mrf.mxu0
  %v196 = vadd.f32 0.0, %v195
  %v197 = vpop.f32.mrf.mxu0
  %198 = vmatprep.mubr.f32.mxu0 0.0
  %199 = vmatmul.mubr.f32.gmra.mxu0 %v115
  %v200 = vpop.f32.mrf.mxu0
  %v201 = vadd.f32 0.0, %v200
  %v202 = vpop.f32.mrf.mxu0
  %203 = vmatprep.mubr.f32.mxu0 0.0
  %204 = vmatmul.mubr.f32.gmra.mxu0 %v117
  %v205 = vpop.f32.mrf.mxu0
  %v206 = vadd.f32 0.0, %v205
  %v207 = vpop.f32.mrf.mxu0
  %208 = vmatprep.mubr.f32.mxu0 0.0
  %209 = vmatmul.mubr.f32.gmra.mxu0 %v119
  %v210 = vpop.f32.mrf.mxu0
  %v211 = vadd.f32 0.0, %v210
  %v212 = vpop.f32.mrf.mxu0
  %213 = vmatprep.mubr.f32.mxu0 0.0
  %214 = vmatmul.mubr.f32.gmra.mxu0 %v121
  %v215 = vpop.f32.mrf.mxu0
  %v216 = vadd.f32 0.0, %v215
  %v217 = vpop.f32.mrf.mxu0
  %218 = vmatprep.mubr.f32.mxu0 0.0
  %219 = vmatmul.mubr.f32.gmra.mxu0 %v123
  %v220 = vpop.f32.mrf.mxu0
  %v221 = vadd.f32 0.0, %v220
  %v222 = vpop.f32.mrf.mxu0
  %223 = vdwg.mxu0
  %226 = vrot.lane.b32.xlu0 %v206, 22
  %v227 = vpop.permute.xlu0 %226
  %228 = vrot.lane.b32.xlu0 %v211, 22
  %v229 = vpop.permute.xlu0 %228
  %234 = vrot.lane.b32.xlu0 %v216, 44
  %v235 = vpop.permute.xlu0 %234
  %236 = vrot.lane.b32.xlu0 %v221, 44
  %v237 = vpop.permute.xlu0 %236
  %v240 = vsel %vm112, %v196, %v227
  %v241 = vsel %vm112, %v201, %v229
  %vm242 = vcmask 359424
  %v243 = vsel %vm242, %v240, %v235
  %v244 = vsel %vm242, %v241, %v237
  %v245 = vld [vmem:[%s0 + $0x20] sm:$0xff]
  %v246 = vld [vmem:[%s0 + $0x28] sm:$0xff]
  %v247 = vld [vmem:[%s0 + $0x30] sm:$0xff]
  %v248 = vld [vmem:[%s0 + $0x38] sm:$0xff]
  %v249 = vld [vmem:[%s1 + $0x28] sm:$0xff]
  %v250 = vld [vmem:[%s1 + $0x30] sm:$0xff]
  %v251 = vadd.f32 %v245, %v243
  %v252 = vadd.f32 %v246, %v244
  %v254 = vsel %vm17, %v249, 0
  %v257 = vsel %vm17, %v250, 0
  %259 = vmatprep.subr.mxu0 0.0
  %260 = vmatpush1.msra.mxu0 0.0
  %261 = vmatprep.subr.mxu0 0.0
  %262 = vmatpush1.msra.mxu0 0.0
  %263 = vmatprep.subr.mxu0 0.0
  %264 = vmatpush1.msra.mxu0 0.0
  %265 = vmatprep.subr.mxu0 0.0
  %266 = vmatpush1.msra.mxu0 0.0
  %267 = vmatprep.subr.mxu0 0.0
  %268 = vmatpush1.msra.mxu0 0.0
  %269 = vmatprep.subr.mxu0 0.0
  %270 = vmatpush1.msra.mxu0 0.0
  %271 = vmatprep.subr.mxu0 0.0
  %272 = vmatpush1.msra.mxu0 0.0
  %273 = vmatprep.subr.mxu0 0.0
  %274 = vmatpush1.msra.mxu0 0.0
  %275 = vmatprep.subr.mxu0 0.0
  %276 = vmatpush1.msra.mxu0 0.0
  %277 = vmatprep.subr.mxu0 0.0
  %278 = vmatpush1.msra.mxu0 0.0
  %279 = vmatprep.subr.mxu0 0.0
  %280 = vmatpush1.msra.mxu0 0.0
  %281 = vmatprep.subr.mxu0 0.0
  %282 = vmatpush1.msra.mxu0 0.0
  %283 = vmatprep.subr.mxu0 0.0
  %284 = vmatpush1.msra.mxu0 %v248
  %285 = vmatprep.subr.mxu0 0.0
  %286 = vmatpush1.msra.mxu0 %v247
  %287 = vmatprep.subr.mxu0 0.0
  %288 = vmatpush1.msra.mxu0 %v252
  %289 = vmatprep.subr.mxu0 0.0
  %290 = vmatpush1.msra.mxu0 %v251
  %291 = vmatprep.subr.mxu0 0.0
  %292 = vmatpush2.msra.mxu0 0.0
  %293 = vmatprep.subr.mxu0 0.0
  %294 = vmatpush2.msra.mxu0 0.0
  %295 = vmatprep.subr.mxu0 0.0
  %296 = vmatpush2.msra.mxu0 0.0
  %297 = vmatprep.subr.mxu0 0.0
  %298 = vmatpush2.msra.mxu0 0.0
  %299 = vmatprep.subr.mxu0 0.0
  %300 = vmatpush2.msra.mxu0 0.0
  %301 = vmatprep.subr.mxu0 0.0
  %302 = vmatpush2.msra.mxu0 0.0
  %303 = vmatprep.subr.mxu0 0.0
  %304 = vmatpush2.msra.mxu0 0.0
  %305 = vmatprep.subr.mxu0 0.0
  %306 = vmatpush2.msra.mxu0 0.0
  %307 = vmatprep.subr.mxu0 0.0
  %308 = vmatpush2.msra.mxu0 0.0
  %309 = vmatprep.subr.mxu0 0.0
  %310 = vmatpush2.msra.mxu0 0.0
  %311 = vmatprep.subr.mxu0 0.0
  %312 = vmatpush2.msra.mxu0 0.0
  %313 = vmatprep.subr.mxu0 0.0
  %314 = vmatpush2.msra.mxu0 0.0
  %315 = vmatprep.subr.mxu0 0.0
  %316 = vmatpush2.msra.mxu0 0.0
  %317 = vmatprep.subr.mxu0 0.0
  %318 = vmatpush2.msra.mxu0 0.0
  %319 = vmatprep.subr.mxu0 0.0
  %320 = vmatpush2.msra.mxu0 0.0
  %321 = vmatprep.subr.mxu0 0.0
  %322 = vmatpush2.msra.mxu0 0.0
  %323 = vmatprep.mubr.f32.mxu0 0.0
  %324 = vmatmul.mubr.f32.gmra.mxu0 %v254
  %v325 = vpop.f32.mrf.mxu0
  %v326 = vadd.f32 0.0, %v325
  %v327 = vpop.f32.mrf.mxu0
  %328 = vmatprep.mubr.f32.mxu0 0.0
  %329 = vmatmul.mubr.f32.gmra.mxu0 %v257
  %v330 = vpop.f32.mrf.mxu0
  %v331 = vadd.f32 0.0, %v330
  %v332 = vpop.f32.mrf.mxu0
  %333 = vdwg.mxu0
  %336 = vrot.lane.b32.xlu0 %v326, 106
  %v337 = vpop.permute.xlu0 %336
  %338 = vrot.lane.b32.xlu0 %v331, 106
  %v339 = vpop.permute.xlu0 %338
  %340 = vrot.lane.b32.xlu0 %v326, 84
  %v341 = vpop.permute.xlu0 %340
  %342 = vrot.lane.b32.xlu0 %v331, 84
  %v343 = vpop.permute.xlu0 %342
  %v344 = vld [vmem:[%s1 + $0x38] sm:$0xff]
  %v345 = vld [vmem:[%s1 + $0x40] sm:$0xff]
  %v346 = vld [vmem:[%s1 + $0x48] sm:$0x3f]
  %v347 = vsel %vm112, %v326, 0
  %v349 = vsel %vm112, %v331, 0
  %v351 = vsel %vm112, %v337, 0
  %v353 = vsel %vm112, %v339, 0
  %v355 = vsel %vm112, %v341, 0
  %v357 = vsel %vm112, %v343, 0
  %v360 = vsel %vm125, %v346, 0
  %362 = vmatprep.subr.mxu0 0.0
  %363 = vmatpush1.msra.mxu0 0.0
  %364 = vmatprep.subr.mxu0 0.0
  %365 = vmatpush1.msra.mxu0 0.0
  %366 = vmatprep.subr.mxu0 0.0
  %367 = vmatpush1.msra.mxu0 0.0
  %368 = vmatprep.subr.mxu0 0.0
  %369 = vmatpush1.msra.mxu0 0.0
  %370 = vmatprep.subr.mxu0 0.0
  %371 = vmatpush1.msra.mxu0 0.0
  %372 = vmatprep.subr.mxu0 0.0
  %373 = vmatpush1.msra.mxu0 0.0
  %374 = vmatprep.subr.mxu0 0.0
  %375 = vmatpush1.msra.mxu0 0.0
  %376 = vmatprep.subr.mxu0 0.0
  %377 = vmatpush1.msra.mxu0 0.0
  %378 = vmatprep.subr.mxu0 0.0
  %379 = vmatpush1.msra.mxu0 0.0
  %380 = vmatprep.subr.mxu0 0.0
  %381 = vmatpush1.msra.mxu0 0.0
  %382 = vmatprep.subr.mxu0 0.0
  %383 = vmatpush1.msra.mxu0 0.0
  %384 = vmatprep.subr.mxu0 0.0
  %385 = vmatpush1.msra.mxu0 0.0
  %386 = vmatprep.subr.mxu0 0.0
  %387 = vmatpush1.msra.mxu0 0.0
  %388 = vmatprep.subr.mxu0 0.0
  %389 = vmatpush1.msra.mxu0 %v360
  %390 = vmatprep.subr.mxu0 0.0
  %391 = vmatpush1.msra.mxu0 %v345
  %392 = vmatprep.subr.mxu0 0.0
  %393 = vmatpush1.msra.mxu0 %v344
  %394 = vmatprep.subr.mxu0 0.0
  %395 = vmatpush2.msra.mxu0 0.0
  %396 = vmatprep.subr.mxu0 0.0
  %397 = vmatpush2.msra.mxu0 0.0
  %398 = vmatprep.subr.mxu0 0.0
  %399 = vmatpush2.msra.mxu0 0.0
  %400 = vmatprep.subr.mxu0 0.0
  %401 = vmatpush2.msra.mxu0 0.0
  %402 = vmatprep.subr.mxu0 0.0
  %403 = vmatpush2.msra.mxu0 0.0
  %404 = vmatprep.subr.mxu0 0.0
  %405 = vmatpush2.msra.mxu0 0.0
  %406 = vmatprep.subr.mxu0 0.0
  %407 = vmatpush2.msra.mxu0 0.0
  %408 = vmatprep.subr.mxu0 0.0
  %409 = vmatpush2.msra.mxu0 0.0
  %410 = vmatprep.subr.mxu0 0.0
  %411 = vmatpush2.msra.mxu0 0.0
  %412 = vmatprep.subr.mxu0 0.0
  %413 = vmatpush2.msra.mxu0 0.0
  %414 = vmatprep.subr.mxu0 0.0
  %415 = vmatpush2.msra.mxu0 0.0
  %416 = vmatprep.subr.mxu0 0.0
  %417 = vmatpush2.msra.mxu0 0.0
  %418 = vmatprep.subr.mxu0 0.0
  %419 = vmatpush2.msra.mxu0 0.0
  %420 = vmatprep.subr.mxu0 0.0
  %421 = vmatpush2.msra.mxu0 0.0
  %422 = vmatprep.subr.mxu0 0.0
  %423 = vmatpush2.msra.mxu0 0.0
  %424 = vmatprep.subr.mxu0 0.0
  %425 = vmatpush2.msra.mxu0 0.0
  %426 = vmatprep.mubr.f32.mxu0 0.0
  %427 = vmatmul.mubr.f32.gmra.mxu0 %v347
  %v428 = vpop.f32.mrf.mxu0
  %v429 = vadd.f32 0.0, %v428
  %v430 = vpop.f32.mrf.mxu0
  %431 = vmatprep.mubr.f32.mxu0 0.0
  %432 = vmatmul.mubr.f32.gmra.mxu0 %v349
  %v433 = vpop.f32.mrf.mxu0
  %v434 = vadd.f32 0.0, %v433
  %v435 = vpop.f32.mrf.mxu0
  %436 = vmatprep.mubr.f32.mxu0 0.0
  %437 = vmatmul.mubr.f32.gmra.mxu0 %v351
  %v438 = vpop.f32.mrf.mxu0
  %v439 = vadd.f32 0.0, %v438
  %v440 = vpop.f32.mrf.mxu0
  %441 = vmatprep.mubr.f32.mxu0 0.0
  %442 = vmatmul.mubr.f32.gmra.mxu0 %v353
  %v443 = vpop.f32.mrf.mxu0
  %v444 = vadd.f32 0.0, %v443
  %v445 = vpop.f32.mrf.mxu0
  %446 = vmatprep.mubr.f32.mxu0 0.0
  %447 = vmatmul.mubr.f32.gmra.mxu0 %v355
  %v448 = vpop.f32.mrf.mxu0
  %v449 = vadd.f32 0.0, %v448
  %v450 = vpop.f32.mrf.mxu0
  %451 = vmatprep.mubr.f32.mxu0 0.0
  %452 = vmatmul.mubr.f32.gmra.mxu0 %v357
  %v453 = vpop.f32.mrf.mxu0
  %v454 = vadd.f32 0.0, %v453
  %v455 = vpop.f32.mrf.mxu0
  %456 = vdwg.mxu0
  %459 = vrot.lane.b32.xlu0 %v439, 22
  %v460 = vpop.permute.xlu0 %459
  %461 = vrot.lane.b32.xlu0 %v444, 22
  %v462 = vpop.permute.xlu0 %461
  %467 = vrot.lane.b32.xlu0 %v449, 44
  %v468 = vpop.permute.xlu0 %467
  %469 = vrot.lane.b32.xlu0 %v454, 44
  %v470 = vpop.permute.xlu0 %469
  %v473 = vsel %vm112, %v429, %v460
  %v474 = vsel %vm112, %v434, %v462
  %v475 = vsel %vm242, %v473, %v468
  %v476 = vsel %vm242, %v474, %v470
  %v477 = vld [vmem:[%s0 + $0x40] sm:$0xff]
  %v478 = vld [vmem:[%s0 + $0x48] sm:$0xff]
  %v479 = vld [vmem:[%s0 + $0x50] sm:$0xff]
  %v480 = vld [vmem:[%s0 + $0x58] sm:$0xff]
  %v481 = vld [vmem:[%s1 + $0x50] sm:$0xff]
  %v482 = vld [vmem:[%s1 + $0x58] sm:$0xff]
  %v483 = vadd.f32 %v477, %v475
  %v484 = vadd.f32 %v478, %v476
  %v486 = vsel %vm17, %v481, 0
  %v489 = vsel %vm17, %v482, 0
  %491 = vmatprep.subr.mxu0 0.0
  %492 = vmatpush1.msra.mxu0 0.0
  %493 = vmatprep.subr.mxu0 0.0
  %494 = vmatpush1.msra.mxu0 0.0
  %495 = vmatprep.subr.mxu0 0.0
  %496 = vmatpush1.msra.mxu0 0.0
  %497 = vmatprep.subr.mxu0 0.0
  %498 = vmatpush1.msra.mxu0 0.0
  %499 = vmatprep.subr.mxu0 0.0
  %500 = vmatpush1.msra.mxu0 0.0
  %501 = vmatprep.subr.mxu0 0.0
  %502 = vmatpush1.msra.mxu0 0.0
  %503 = vmatprep.subr.mxu0 0.0
  %504 = vmatpush1.msra.mxu0 0.0
  %505 = vmatprep.subr.mxu0 0.0
  %506 = vmatpush1.msra.mxu0 0.0
  %507 = vmatprep.subr.mxu0 0.0
  %508 = vmatpush1.msra.mxu0 0.0
  %509 = vmatprep.subr.mxu0 0.0
  %510 = vmatpush1.msra.mxu0 0.0
  %511 = vmatprep.subr.mxu0 0.0
  %512 = vmatpush1.msra.mxu0 0.0
  %513 = vmatprep.subr.mxu0 0.0
  %514 = vmatpush1.msra.mxu0 0.0
  %515 = vmatprep.subr.mxu0 0.0
  %516 = vmatpush1.msra.mxu0 %v480
  %517 = vmatprep.subr.mxu0 0.0
  %518 = vmatpush1.msra.mxu0 %v479
  %519 = vmatprep.subr.mxu0 0.0
  %520 = vmatpush1.msra.mxu0 %v484
  %521 = vmatprep.subr.mxu0 0.0
  %522 = vmatpush1.msra.mxu0 %v483
  %523 = vmatprep.subr.mxu0 0.0
  %524 = vmatpush2.msra.mxu0 0.0
  %525 = vmatprep.subr.mxu0 0.0
  %526 = vmatpush2.msra.mxu0 0.0
  %527 = vmatprep.subr.mxu0 0.0
  %528 = vmatpush2.msra.mxu0 0.0
  %529 = vmatprep.subr.mxu0 0.0
  %530 = vmatpush2.msra.mxu0 0.0
  %531 = vmatprep.subr.mxu0 0.0
  %532 = vmatpush2.msra.mxu0 0.0
  %533 = vmatprep.subr.mxu0 0.0
  %534 = vmatpush2.msra.mxu0 0.0
  %535 = vmatprep.subr.mxu0 0.0
  %536 = vmatpush2.msra.mxu0 0.0
  %537 = vmatprep.subr.mxu0 0.0
  %538 = vmatpush2.msra.mxu0 0.0
  %539 = vmatprep.subr.mxu0 0.0
  %540 = vmatpush2.msra.mxu0 0.0
  %541 = vmatprep.subr.mxu0 0.0
  %542 = vmatpush2.msra.mxu0 0.0
  %543 = vmatprep.subr.mxu0 0.0
  %544 = vmatpush2.msra.mxu0 0.0
  %545 = vmatprep.subr.mxu0 0.0
  %546 = vmatpush2.msra.mxu0 0.0
  %547 = vmatprep.subr.mxu0 0.0
  %548 = vmatpush2.msra.mxu0 0.0
  %549 = vmatprep.subr.mxu0 0.0
  %550 = vmatpush2.msra.mxu0 0.0
  %551 = vmatprep.subr.mxu0 0.0
  %552 = vmatpush2.msra.mxu0 0.0
  %553 = vmatprep.subr.mxu0 0.0
  %554 = vmatpush2.msra.mxu0 0.0
  %555 = vmatprep.mubr.f32.mxu0 0.0
  %556 = vmatmul.mubr.f32.gmra.mxu0 %v486
  %v557 = vpop.f32.mrf.mxu0
  %v558 = vadd.f32 0.0, %v557
  %v559 = vpop.f32.mrf.mxu0
  %560 = vmatprep.mubr.f32.mxu0 0.0
  %561 = vmatmul.mubr.f32.gmra.mxu0 %v489
  %v562 = vpop.f32.mrf.mxu0
  %v563 = vadd.f32 0.0, %v562
  %v564 = vpop.f32.mrf.mxu0
  %565 = vdwg.mxu0
  %568 = vrot.lane.b32.xlu0 %v558, 106
  %v569 = vpop.permute.xlu0 %568
  %570 = vrot.lane.b32.xlu0 %v563, 106
  %v571 = vpop.permute.xlu0 %570
  %572 = vrot.lane.b32.xlu0 %v558, 84
  %v573 = vpop.permute.xlu0 %572
  %574 = vrot.lane.b32.xlu0 %v563, 84
  %v575 = vpop.permute.xlu0 %574
  %v576 = vld [vmem:[%s1 + $0x60] sm:$0xff]
  %v577 = vld [vmem:[%s1 + $0x68] sm:$0xff]
  %v578 = vld [vmem:[%s1 + $0x70] sm:$0x3f]
  %v579 = vsel %vm112, %v558, 0
  %v581 = vsel %vm112, %v563, 0
  %v583 = vsel %vm112, %v569, 0
  %v585 = vsel %vm112, %v571, 0
  %v587 = vsel %vm112, %v573, 0
  %v589 = vsel %vm112, %v575, 0
  %v592 = vsel %vm125, %v578, 0
  %594 = vmatprep.subr.mxu0 0.0
  %595 = vmatpush1.msra.mxu0 0.0
  %596 = vmatprep.subr.mxu0 0.0
  %597 = vmatpush1.msra.mxu0 0.0
  %598 = vmatprep.subr.mxu0 0.0
  %599 = vmatpush1.msra.mxu0 0.0
  %600 = vmatprep.subr.mxu0 0.0
  %601 = vmatpush1.msra.mxu0 0.0
  %602 = vmatprep.subr.mxu0 0.0
  %603 = vmatpush1.msra.mxu0 0.0
  %604 = vmatprep.subr.mxu0 0.0
  %605 = vmatpush1.msra.mxu0 0.0
  %606 = vmatprep.subr.mxu0 0.0
  %607 = vmatpush1.msra.mxu0 0.0
  %608 = vmatprep.subr.mxu0 0.0
  %609 = vmatpush1.msra.mxu0 0.0
  %610 = vmatprep.subr.mxu0 0.0
  %611 = vmatpush1.msra.mxu0 0.0
  %612 = vmatprep.subr.mxu0 0.0
  %613 = vmatpush1.msra.mxu0 0.0
  %614 = vmatprep.subr.mxu0 0.0
  %615 = vmatpush1.msra.mxu0 0.0
  %616 = vmatprep.subr.mxu0 0.0
  %617 = vmatpush1.msra.mxu0 0.0
  %618 = vmatprep.subr.mxu0 0.0
  %619 = vmatpush1.msra.mxu0 0.0
  %620 = vmatprep.subr.mxu0 0.0
  %621 = vmatpush1.msra.mxu0 %v592
  %622 = vmatprep.subr.mxu0 0.0
  %623 = vmatpush1.msra.mxu0 %v577
  %624 = vmatprep.subr.mxu0 0.0
  %625 = vmatpush1.msra.mxu0 %v576
  %626 = vmatprep.subr.mxu0 0.0
  %627 = vmatpush2.msra.mxu0 0.0
  %628 = vmatprep.subr.mxu0 0.0
  %629 = vmatpush2.msra.mxu0 0.0
  %630 = vmatprep.subr.mxu0 0.0
  %631 = vmatpush2.msra.mxu0 0.0
  %632 = vmatprep.subr.mxu0 0.0
  %633 = vmatpush2.msra.mxu0 0.0
  %634 = vmatprep.subr.mxu0 0.0
  %635 = vmatpush2.msra.mxu0 0.0
  %636 = vmatprep.subr.mxu0 0.0
  %637 = vmatpush2.msra.mxu0 0.0
  %638 = vmatprep.subr.mxu0 0.0
  %639 = vmatpush2.msra.mxu0 0.0
  %640 = vmatprep.subr.mxu0 0.0
  %641 = vmatpush2.msra.mxu0 0.0
  %642 = vmatprep.subr.mxu0 0.0
  %643 = vmatpush2.msra.mxu0 0.0
  %644 = vmatprep.subr.mxu0 0.0
  %645 = vmatpush2.msra.mxu0 0.0
  %646 = vmatprep.subr.mxu0 0.0
  %647 = vmatpush2.msra.mxu0 0.0
  %648 = vmatprep.subr.mxu0 0.0
  %649 = vmatpush2.msra.mxu0 0.0
  %650 = vmatprep.subr.mxu0 0.0
  %651 = vmatpush2.msra.mxu0 0.0
  %652 = vmatprep.subr.mxu0 0.0
  %653 = vmatpush2.msra.mxu0 0.0
  %654 = vmatprep.subr.mxu0 0.0
  %655 = vmatpush2.msra.mxu0 0.0
  %656 = vmatprep.subr.mxu0 0.0
  %657 = vmatpush2.msra.mxu0 0.0
  %658 = vmatprep.mubr.f32.mxu0 0.0
  %659 = vmatmul.mubr.f32.gmra.mxu0 %v579
  %v660 = vpop.f32.mrf.mxu0
  %v661 = vadd.f32 0.0, %v660
  %v662 = vpop.f32.mrf.mxu0
  %663 = vmatprep.mubr.f32.mxu0 0.0
  %664 = vmatmul.mubr.f32.gmra.mxu0 %v581
  %v665 = vpop.f32.mrf.mxu0
  %v666 = vadd.f32 0.0, %v665
  %v667 = vpop.f32.mrf.mxu0
  %668 = vmatprep.mubr.f32.mxu0 0.0
  %669 = vmatmul.mubr.f32.gmra.mxu0 %v583
  %v670 = vpop.f32.mrf.mxu0
  %v671 = vadd.f32 0.0, %v670
  %v672 = vpop.f32.mrf.mxu0
  %673 = vmatprep.mubr.f32.mxu0 0.0
  %674 = vmatmul.mubr.f32.gmra.mxu0 %v585
  %v675 = vpop.f32.mrf.mxu0
  %v676 = vadd.f32 0.0, %v675
  %v677 = vpop.f32.mrf.mxu0
  %678 = vmatprep.mubr.f32.mxu0 0.0
  %679 = vmatmul.mubr.f32.gmra.mxu0 %v587
  %v680 = vpop.f32.mrf.mxu0
  %v681 = vadd.f32 0.0, %v680
  %v682 = vpop.f32.mrf.mxu0
  %683 = vmatprep.mubr.f32.mxu0 0.0
  %684 = vmatmul.mubr.f32.gmra.mxu0 %v589
  %v685 = vpop.f32.mrf.mxu0
  %v686 = vadd.f32 0.0, %v685
  %v687 = vpop.f32.mrf.mxu0
  %688 = vdwg.mxu0
  %691 = vrot.lane.b32.xlu0 %v671, 22
  %v692 = vpop.permute.xlu0 %691
  %693 = vrot.lane.b32.xlu0 %v676, 22
  %v694 = vpop.permute.xlu0 %693
  %699 = vrot.lane.b32.xlu0 %v681, 44
  %v700 = vpop.permute.xlu0 %699
  %701 = vrot.lane.b32.xlu0 %v686, 44
  %v702 = vpop.permute.xlu0 %701
  %v705 = vsel %vm112, %v661, %v692
  %v706 = vsel %vm112, %v666, %v694
  %v707 = vsel %vm242, %v705, %v700
  %v708 = vsel %vm242, %v706, %v702
  %v709 = vld [vmem:[%s0 + $0x60] sm:$0xff]
  %v710 = vld [vmem:[%s0 + $0x68] sm:$0xff]
  %v711 = vld [vmem:[%s0 + $0x70] sm:$0xff]
  %v712 = vld [vmem:[%s0 + $0x78] sm:$0xff]
  %v713 = vld [vmem:[%s1 + $0x78] sm:$0xff]
  %v714 = vld [vmem:[%s1 + $0x80] sm:$0xff]
  %v715 = vadd.f32 %v709, %v707
  %v716 = vadd.f32 %v710, %v708
  %v718 = vsel %vm17, %v713, 0
  %v721 = vsel %vm17, %v714, 0
  %723 = vmatprep.subr.mxu0 0.0
  %724 = vmatpush1.msra.mxu0 0.0
  %725 = vmatprep.subr.mxu0 0.0
  %726 = vmatpush1.msra.mxu0 0.0
  %727 = vmatprep.subr.mxu0 0.0
  %728 = vmatpush1.msra.mxu0 0.0
  %729 = vmatprep.subr.mxu0 0.0
  %730 = vmatpush1.msra.mxu0 0.0
  %731 = vmatprep.subr.mxu0 0.0
  %732 = vmatpush1.msra.mxu0 0.0
  %733 = vmatprep.subr.mxu0 0.0
  %734 = vmatpush1.msra.mxu0 0.0
  %735 = vmatprep.subr.mxu0 0.0
  %736 = vmatpush1.msra.mxu0 0.0
  %737 = vmatprep.subr.mxu0 0.0
  %738 = vmatpush1.msra.mxu0 0.0
  %739 = vmatprep.subr.mxu0 0.0
  %740 = vmatpush1.msra.mxu0 0.0
  %741 = vmatprep.subr.mxu0 0.0
  %742 = vmatpush1.msra.mxu0 0.0
  %743 = vmatprep.subr.mxu0 0.0
  %744 = vmatpush1.msra.mxu0 0.0
  %745 = vmatprep.subr.mxu0 0.0
  %746 = vmatpush1.msra.mxu0 0.0
  %747 = vmatprep.subr.mxu0 0.0
  %748 = vmatpush1.msra.mxu0 %v712
  %749 = vmatprep.subr.mxu0 0.0
  %750 = vmatpush1.msra.mxu0 %v711
  %751 = vmatprep.subr.mxu0 0.0
  %752 = vmatpush1.msra.mxu0 %v716
  %753 = vmatprep.subr.mxu0 0.0
  %754 = vmatpush1.msra.mxu0 %v715
  %755 = vmatprep.subr.mxu0 0.0
  %756 = vmatpush2.msra.mxu0 0.0
  %757 = vmatprep.subr.mxu0 0.0
  %758 = vmatpush2.msra.mxu0 0.0
  %759 = vmatprep.subr.mxu0 0.0
  %760 = vmatpush2.msra.mxu0 0.0
  %761 = vmatprep.subr.mxu0 0.0
  %762 = vmatpush2.msra.mxu0 0.0
  %763 = vmatprep.subr.mxu0 0.0
  %764 = vmatpush2.msra.mxu0 0.0
  %765 = vmatprep.subr.mxu0 0.0
  %766 = vmatpush2.msra.mxu0 0.0
  %767 = vmatprep.subr.mxu0 0.0
  %768 = vmatpush2.msra.mxu0 0.0
  %769 = vmatprep.subr.mxu0 0.0
  %770 = vmatpush2.msra.mxu0 0.0
  %771 = vmatprep.subr.mxu0 0.0
  %772 = vmatpush2.msra.mxu0 0.0
  %773 = vmatprep.subr.mxu0 0.0
  %774 = vmatpush2.msra.mxu0 0.0
  %775 = vmatprep.subr.mxu0 0.0
  %776 = vmatpush2.msra.mxu0 0.0
  %777 = vmatprep.subr.mxu0 0.0
  %778 = vmatpush2.msra.mxu0 0.0
  %779 = vmatprep.subr.mxu0 0.0
  %780 = vmatpush2.msra.mxu0 0.0
  %781 = vmatprep.subr.mxu0 0.0
  %782 = vmatpush2.msra.mxu0 0.0
  %783 = vmatprep.subr.mxu0 0.0
  %784 = vmatpush2.msra.mxu0 0.0
  %785 = vmatprep.subr.mxu0 0.0
  %786 = vmatpush2.msra.mxu0 0.0
  %787 = vmatprep.mubr.f32.mxu0 0.0
  %788 = vmatmul.mubr.f32.gmra.mxu0 %v718
  %v789 = vpop.f32.mrf.mxu0
  %v790 = vadd.f32 0.0, %v789
  %v791 = vpop.f32.mrf.mxu0
  %792 = vmatprep.mubr.f32.mxu0 0.0
  %793 = vmatmul.mubr.f32.gmra.mxu0 %v721
  %v794 = vpop.f32.mrf.mxu0
  %v795 = vadd.f32 0.0, %v794
  %v796 = vpop.f32.mrf.mxu0
  %797 = vdwg.mxu0
  %800 = vrot.lane.b32.xlu0 %v790, 106
  %v801 = vpop.permute.xlu0 %800
  %802 = vrot.lane.b32.xlu0 %v795, 106
  %v803 = vpop.permute.xlu0 %802
  %804 = vrot.lane.b32.xlu0 %v790, 84
  %v805 = vpop.permute.xlu0 %804
  %806 = vrot.lane.b32.xlu0 %v795, 84
  %v807 = vpop.permute.xlu0 %806
  %v808 = vld [vmem:[%s1 + $0x88] sm:$0xff]
  %v809 = vld [vmem:[%s1 + $0x90] sm:$0xff]
  %v810 = vld [vmem:[%s1 + $0x98] sm:$0x3f]
  %v811 = vsel %vm112, %v790, 0
  %v813 = vsel %vm112, %v795, 0
  %v815 = vsel %vm112, %v801, 0
  %v817 = vsel %vm112, %v803, 0
  %v819 = vsel %vm112, %v805, 0
  %v821 = vsel %vm112, %v807, 0
  %v824 = vsel %vm125, %v810, 0
  %826 = vmatprep.subr.mxu0 0.0
  %827 = vmatpush1.msra.mxu0 0.0
  %828 = vmatprep.subr.mxu0 0.0
  %829 = vmatpush1.msra.mxu0 0.0
  %830 = vmatprep.subr.mxu0 0.0
  %831 = vmatpush1.msra.mxu0 0.0
  %832 = vmatprep.subr.mxu0 0.0
  %833 = vmatpush1.msra.mxu0 0.0
  %834 = vmatprep.subr.mxu0 0.0
  %835 = vmatpush1.msra.mxu0 0.0
  %836 = vmatprep.subr.mxu0 0.0
  %837 = vmatpush1.msra.mxu0 0.0
  %838 = vmatprep.subr.mxu0 0.0
  %839 = vmatpush1.msra.mxu0 0.0
  %840 = vmatprep.subr.mxu0 0.0
  %841 = vmatpush1.msra.mxu0 0.0
  %842 = vmatprep.subr.mxu0 0.0
  %843 = vmatpush1.msra.mxu0 0.0
  %844 = vmatprep.subr.mxu0 0.0
  %845 = vmatpush1.msra.mxu0 0.0
  %846 = vmatprep.subr.mxu0 0.0
  %847 = vmatpush1.msra.mxu0 0.0
  %848 = vmatprep.subr.mxu0 0.0
  %849 = vmatpush1.msra.mxu0 0.0
  %850 = vmatprep.subr.mxu0 0.0
  %851 = vmatpush1.msra.mxu0 0.0
  %852 = vmatprep.subr.mxu0 0.0
  %853 = vmatpush1.msra.mxu0 %v824
  %854 = vmatprep.subr.mxu0 0.0
  %855 = vmatpush1.msra.mxu0 %v809
  %856 = vmatprep.subr.mxu0 0.0
  %857 = vmatpush1.msra.mxu0 %v808
  %858 = vmatprep.subr.mxu0 0.0
  %859 = vmatpush2.msra.mxu0 0.0
  %860 = vmatprep.subr.mxu0 0.0
  %861 = vmatpush2.msra.mxu0 0.0
  %862 = vmatprep.subr.mxu0 0.0
  %863 = vmatpush2.msra.mxu0 0.0
  %864 = vmatprep.subr.mxu0 0.0
  %865 = vmatpush2.msra.mxu0 0.0
  %866 = vmatprep.subr.mxu0 0.0
  %867 = vmatpush2.msra.mxu0 0.0
  %868 = vmatprep.subr.mxu0 0.0
  %869 = vmatpush2.msra.mxu0 0.0
  %870 = vmatprep.subr.mxu0 0.0
  %871 = vmatpush2.msra.mxu0 0.0
  %872 = vmatprep.subr.mxu0 0.0
  %873 = vmatpush2.msra.mxu0 0.0
  %874 = vmatprep.subr.mxu0 0.0
  %875 = vmatpush2.msra.mxu0 0.0
  %876 = vmatprep.subr.mxu0 0.0
  %877 = vmatpush2.msra.mxu0 0.0
  %878 = vmatprep.subr.mxu0 0.0
  %879 = vmatpush2.msra.mxu0 0.0
  %880 = vmatprep.subr.mxu0 0.0
  %881 = vmatpush2.msra.mxu0 0.0
  %882 = vmatprep.subr.mxu0 0.0
  %883 = vmatpush2.msra.mxu0 0.0
  %884 = vmatprep.subr.mxu0 0.0
  %885 = vmatpush2.msra.mxu0 0.0
  %886 = vmatprep.subr.mxu0 0.0
  %887 = vmatpush2.msra.mxu0 0.0
  %888 = vmatprep.subr.mxu0 0.0
  %889 = vmatpush2.msra.mxu0 0.0
  %890 = vmatprep.mubr.f32.mxu0 0.0
  %891 = vmatmul.mubr.f32.gmra.mxu0 %v811
  %v892 = vpop.f32.mrf.mxu0
  %v893 = vadd.f32 0.0, %v892
  %v894 = vpop.f32.mrf.mxu0
  %895 = vmatprep.mubr.f32.mxu0 0.0
  %896 = vmatmul.mubr.f32.gmra.mxu0 %v813
  %v897 = vpop.f32.mrf.mxu0
  %v898 = vadd.f32 0.0, %v897
  %v899 = vpop.f32.mrf.mxu0
  %900 = vmatprep.mubr.f32.mxu0 0.0
  %901 = vmatmul.mubr.f32.gmra.mxu0 %v815
  %v902 = vpop.f32.mrf.mxu0
  %v903 = vadd.f32 0.0, %v902
  %v904 = vpop.f32.mrf.mxu0
  %905 = vmatprep.mubr.f32.mxu0 0.0
  %906 = vmatmul.mubr.f32.gmra.mxu0 %v817
  %v907 = vpop.f32.mrf.mxu0
  %v908 = vadd.f32 0.0, %v907
  %v909 = vpop.f32.mrf.mxu0
  %910 = vmatprep.mubr.f32.mxu0 0.0
  %911 = vmatmul.mubr.f32.gmra.mxu0 %v819
  %v912 = vpop.f32.mrf.mxu0
  %v913 = vadd.f32 0.0, %v912
  %v914 = vpop.f32.mrf.mxu0
  %915 = vmatprep.mubr.f32.mxu0 0.0
  %916 = vmatmul.mubr.f32.gmra.mxu0 %v821
  %v917 = vpop.f32.mrf.mxu0
  %v918 = vadd.f32 0.0, %v917
  %v919 = vpop.f32.mrf.mxu0
  %920 = vdwg.mxu0
  %923 = vrot.lane.b32.xlu0 %v903, 24
  %v924 = vpop.permute.xlu0 %923
  %925 = vrot.lane.b32.xlu0 %v908, 24
  %v926 = vpop.permute.xlu0 %925
  %931 = vrot.lane.b32.xlu0 %v913, 48
  %v932 = vpop.permute.xlu0 %931
  %933 = vrot.lane.b32.xlu0 %v918, 48
  %v934 = vpop.permute.xlu0 %933
  %vm937 = vcmask 195584
  %v938 = vsel %vm937, %v893, %v924
  %v939 = vsel %vm937, %v898, %v926
  %vm940 = vcmask 392192
  %v941 = vsel %vm940, %v938, %v932
  %v942 = vsel %vm940, %v939, %v934
  %v943 = vld [vmem:[%s0 + $0x80] sm:$0xff]
  %v944 = vld [vmem:[%s0 + $0x88] sm:$0xff]
  %v945 = vld [vmem:[%s0 + $0x90] sm:$0xff]
  %v946 = vld [vmem:[%s0 + $0x98] sm:$0xff]
  %v947 = vld [vmem:[%s1 + $0xa0] sm:$0xff]
  %v948 = vld [vmem:[%s1 + $0xa8] sm:$0xff]
  %v949 = vadd.f32 %v943, %v941
  %v950 = vadd.f32 %v944, %v942
  %v952 = vsel %vm17, %v947, 0
  %v955 = vsel %vm17, %v948, 0
  %957 = vmatprep.subr.mxu0 0.0
  %958 = vmatpush1.msra.mxu0 0.0
  %959 = vmatprep.subr.mxu0 0.0
  %960 = vmatpush1.msra.mxu0 0.0
  %961 = vmatprep.subr.mxu0 0.0
  %962 = vmatpush1.msra.mxu0 0.0
  %963 = vmatprep.subr.mxu0 0.0
  %964 = vmatpush1.msra.mxu0 0.0
  %965 = vmatprep.subr.mxu0 0.0
  %966 = vmatpush1.msra.mxu0 0.0
  %967 = vmatprep.subr.mxu0 0.0
  %968 = vmatpush1.msra.mxu0 0.0
  %969 = vmatprep.subr.mxu0 0.0
  %970 = vmatpush1.msra.mxu0 0.0
  %971 = vmatprep.subr.mxu0 0.0
  %972 = vmatpush1.msra.mxu0 0.0
  %973 = vmatprep.subr.mxu0 0.0
  %974 = vmatpush1.msra.mxu0 0.0
  %975 = vmatprep.subr.mxu0 0.0
  %976 = vmatpush1.msra.mxu0 0.0
  %977 = vmatprep.subr.mxu0 0.0
  %978 = vmatpush1.msra.mxu0 0.0
  %979 = vmatprep.subr.mxu0 0.0
  %980 = vmatpush1.msra.mxu0 0.0
  %981 = vmatprep.subr.mxu0 0.0
  %982 = vmatpush1.msra.mxu0 %v946
  %983 = vmatprep.subr.mxu0 0.0
  %984 = vmatpush1.msra.mxu0 %v945
  %985 = vmatprep.subr.mxu0 0.0
  %986 = vmatpush1.msra.mxu0 %v950
  %987 = vmatprep.subr.mxu0 0.0
  %988 = vmatpush1.msra.mxu0 %v949
  %989 = vmatprep.subr.mxu0 0.0
  %990 = vmatpush2.msra.mxu0 0.0
  %991 = vmatprep.subr.mxu0 0.0
  %992 = vmatpush2.msra.mxu0 0.0
  %993 = vmatprep.subr.mxu0 0.0
  %994 = vmatpush2.msra.mxu0 0.0
  %995 = vmatprep.subr.mxu0 0.0
  %996 = vmatpush2.msra.mxu0 0.0
  %997 = vmatprep.subr.mxu0 0.0
  %998 = vmatpush2.msra.mxu0 0.0
  %999 = vmatprep.subr.mxu0 0.0
  %1000 = vmatpush2.msra.mxu0 0.0
  %1001 = vmatprep.subr.mxu0 0.0
  %1002 = vmatpush2.msra.mxu0 0.0
  %1003 = vmatprep.subr.mxu0 0.0
  %1004 = vmatpush2.msra.mxu0 0.0
  %1005 = vmatprep.subr.mxu0 0.0
  %1006 = vmatpush2.msra.mxu0 0.0
  %1007 = vmatprep.subr.mxu0 0.0
  %1008 = vmatpush2.msra.mxu0 0.0
  %1009 = vmatprep.subr.mxu0 0.0
  %1010 = vmatpush2.msra.mxu0 0.0
  %1011 = vmatprep.subr.mxu0 0.0
  %1012 = vmatpush2.msra.mxu0 0.0
  %1013 = vmatprep.subr.mxu0 0.0
  %1014 = vmatpush2.msra.mxu0 0.0
  %1015 = vmatprep.subr.mxu0 0.0
  %1016 = vmatpush2.msra.mxu0 0.0
  %1017 = vmatprep.subr.mxu0 0.0
  %1018 = vmatpush2.msra.mxu0 0.0
  %1019 = vmatprep.subr.mxu0 0.0
  %1020 = vmatpush2.msra.mxu0 0.0
  %1021 = vmatprep.mubr.f32.mxu0 0.0
  %1022 = vmatmul.mubr.f32.gmra.mxu0 %v952
  %v1023 = vpop.f32.mrf.mxu0
  %v1024 = vadd.f32 0.0, %v1023
  %v1025 = vpop.f32.mrf.mxu0
  %1026 = vmatprep.mubr.f32.mxu0 0.0
  %1027 = vmatmul.mubr.f32.gmra.mxu0 %v955
  %v1028 = vpop.f32.mrf.mxu0
  %v1029 = vadd.f32 0.0, %v1028
  %v1030 = vpop.f32.mrf.mxu0
  %1031 = vdwg.mxu0
  %1034 = vrot.lane.b32.xlu0 %v1024, 104
  %v1035 = vpop.permute.xlu0 %1034
  %1036 = vrot.lane.b32.xlu0 %v1029, 104
  %v1037 = vpop.permute.xlu0 %1036
  %1038 = vrot.lane.b32.xlu0 %v1024, 80
  %v1039 = vpop.permute.xlu0 %1038
  %1040 = vrot.lane.b32.xlu0 %v1029, 80
  %v1041 = vpop.permute.xlu0 %1040
  %v1042 = vld [vmem:[%s1 + $0xb0] sm:$0xff]
  %v1043 = vld [vmem:[%s1 + $0xb8] sm:$0xff]
  %v1044 = vld [vmem:[%s1 + $0xc0] sm:$0xff]
  %v1045 = vsel %vm937, %v1024, 0
  %v1047 = vsel %vm937, %v1029, 0
  %v1049 = vsel %vm937, %v1035, 0
  %v1051 = vsel %vm937, %v1037, 0
  %v1053 = vsel %vm937, %v1039, 0
  %v1055 = vsel %vm937, %v1041, 0
  %1057 = vmatprep.subr.mxu0 0.0
  %1058 = vmatpush1.msra.mxu0 0.0
  %1059 = vmatprep.subr.mxu0 0.0
  %1060 = vmatpush1.msra.mxu0 0.0
  %1061 = vmatprep.subr.mxu0 0.0
  %1062 = vmatpush1.msra.mxu0 0.0
  %1063 = vmatprep.subr.mxu0 0.0
  %1064 = vmatpush1.msra.mxu0 0.0
  %1065 = vmatprep.subr.mxu0 0.0
  %1066 = vmatpush1.msra.mxu0 0.0
  %1067 = vmatprep.subr.mxu0 0.0
  %1068 = vmatpush1.msra.mxu0 0.0
  %1069 = vmatprep.subr.mxu0 0.0
  %1070 = vmatpush1.msra.mxu0 0.0
  %1071 = vmatprep.subr.mxu0 0.0
  %1072 = vmatpush1.msra.mxu0 0.0
  %1073 = vmatprep.subr.mxu0 0.0
  %1074 = vmatpush1.msra.mxu0 0.0
  %1075 = vmatprep.subr.mxu0 0.0
  %1076 = vmatpush1.msra.mxu0 0.0
  %1077 = vmatprep.subr.mxu0 0.0
  %1078 = vmatpush1.msra.mxu0 0.0
  %1079 = vmatprep.subr.mxu0 0.0
  %1080 = vmatpush1.msra.mxu0 0.0
  %1081 = vmatprep.subr.mxu0 0.0
  %1082 = vmatpush1.msra.mxu0 0.0
  %1083 = vmatprep.subr.mxu0 0.0
  %1084 = vmatpush1.msra.mxu0 %v1044
  %1085 = vmatprep.subr.mxu0 0.0
  %1086 = vmatpush1.msra.mxu0 %v1043
  %1087 = vmatprep.subr.mxu0 0.0
  %1088 = vmatpush1.msra.mxu0 %v1042
  %1089 = vmatprep.subr.mxu0 0.0
  %1090 = vmatpush2.msra.mxu0 0.0
  %1091 = vmatprep.subr.mxu0 0.0
  %1092 = vmatpush2.msra.mxu0 0.0
  %1093 = vmatprep.subr.mxu0 0.0
  %1094 = vmatpush2.msra.mxu0 0.0
  %1095 = vmatprep.subr.mxu0 0.0
  %1096 = vmatpush2.msra.mxu0 0.0
  %1097 = vmatprep.subr.mxu0 0.0
  %1098 = vmatpush2.msra.mxu0 0.0
  %1099 = vmatprep.subr.mxu0 0.0
  %1100 = vmatpush2.msra.mxu0 0.0
  %1101 = vmatprep.subr.mxu0 0.0
  %1102 = vmatpush2.msra.mxu0 0.0
  %1103 = vmatprep.subr.mxu0 0.0
  %1104 = vmatpush2.msra.mxu0 0.0
  %1105 = vmatprep.subr.mxu0 0.0
  %1106 = vmatpush2.msra.mxu0 0.0
  %1107 = vmatprep.subr.mxu0 0.0
  %1108 = vmatpush2.msra.mxu0 0.0
  %1109 = vmatprep.subr.mxu0 0.0
  %1110 = vmatpush2.msra.mxu0 0.0
  %1111 = vmatprep.subr.mxu0 0.0
  %1112 = vmatpush2.msra.mxu0 0.0
  %1113 = vmatprep.subr.mxu0 0.0
  %1114 = vmatpush2.msra.mxu0 0.0
  %1115 = vmatprep.subr.mxu0 0.0
  %1116 = vmatpush2.msra.mxu0 0.0
  %1117 = vmatprep.subr.mxu0 0.0
  %1118 = vmatpush2.msra.mxu0 0.0
  %1119 = vmatprep.subr.mxu0 0.0
  %1120 = vmatpush2.msra.mxu0 0.0
  %1121 = vmatprep.mubr.f32.mxu0 0.0
  %1122 = vmatmul.mubr.f32.gmra.mxu0 %v1045
  %v1123 = vpop.f32.mrf.mxu0
  %v1124 = vadd.f32 0.0, %v1123
  %v1125 = vpop.f32.mrf.mxu0
  %1126 = vmatprep.mubr.f32.mxu0 0.0
  %1127 = vmatmul.mubr.f32.gmra.mxu0 %v1047
  %v1128 = vpop.f32.mrf.mxu0
  %v1129 = vadd.f32 0.0, %v1128
  %v1130 = vpop.f32.mrf.mxu0
  %1131 = vmatprep.mubr.f32.mxu0 0.0
  %1132 = vmatmul.mubr.f32.gmra.mxu0 %v1049
  %v1133 = vpop.f32.mrf.mxu0
  %v1134 = vadd.f32 0.0, %v1133
  %v1135 = vpop.f32.mrf.mxu0
  %1136 = vmatprep.mubr.f32.mxu0 0.0
  %1137 = vmatmul.mubr.f32.gmra.mxu0 %v1051
  %v1138 = vpop.f32.mrf.mxu0
  %v1139 = vadd.f32 0.0, %v1138
  %v1140 = vpop.f32.mrf.mxu0
  %1141 = vmatprep.mubr.f32.mxu0 0.0
  %1142 = vmatmul.mubr.f32.gmra.mxu0 %v1053
  %v1143 = vpop.f32.mrf.mxu0
  %v1144 = vadd.f32 0.0, %v1143
  %v1145 = vpop.f32.mrf.mxu0
  %1146 = vmatprep.mubr.f32.mxu0 0.0
  %1147 = vmatmul.mubr.f32.gmra.mxu0 %v1055
  %v1148 = vpop.f32.mrf.mxu0
  %v1149 = vadd.f32 0.0, %v1148
  %v1150 = vpop.f32.mrf.mxu0
  %1151 = vdwg.mxu0
  %1154 = vrot.lane.b32.xlu0 %v1134, 26
  %v1155 = vpop.permute.xlu0 %1154
  %1156 = vrot.lane.b32.xlu0 %v1139, 26
  %v1157 = vpop.permute.xlu0 %1156
  %1162 = vrot.lane.b32.xlu0 %v1144, 52
  %v1163 = vpop.permute.xlu0 %1162
  %1164 = vrot.lane.b32.xlu0 %v1149, 52
  %v1165 = vpop.permute.xlu0 %1164
  %vm1168 = vcmask 211968
  %v1169 = vsel %vm1168, %v1124, %v1155
  %v1170 = vsel %vm1168, %v1129, %v1157
  %vm1171 = vcmask 424960
  %v1172 = vsel %vm1171, %v1169, %v1163
  %v1173 = vsel %vm1171, %v1170, %v1165
  %v1174 = vld [vmem:[%s0 + $0xa0] sm:$0xff]
  %v1175 = vld [vmem:[%s0 + $0xa8] sm:$0xff]
  %v1176 = vld [vmem:[%s0 + $0xb0] sm:$0xff]
  %v1177 = vld [vmem:[%s0 + $0xb8] sm:$0xff]
  %v1178 = vld [vmem:[%s1 + $0xc8] sm:$0xff]
  %v1179 = vld [vmem:[%s1 + $0xd0] sm:$0xff]
  %v1180 = vadd.f32 %v1174, %v1172
  %v1181 = vadd.f32 %v1175, %v1173
  %v1183 = vsel %vm17, %v1178, 0
  %v1186 = vsel %vm17, %v1179, 0
  %1188 = vmatprep.subr.mxu0 0.0
  %1189 = vmatpush1.msra.mxu0 0.0
  %1190 = vmatprep.subr.mxu0 0.0
  %1191 = vmatpush1.msra.mxu0 0.0
  %1192 = vmatprep.subr.mxu0 0.0
  %1193 = vmatpush1.msra.mxu0 0.0
  %1194 = vmatprep.subr.mxu0 0.0
  %1195 = vmatpush1.msra.mxu0 0.0
  %1196 = vmatprep.subr.mxu0 0.0
  %1197 = vmatpush1.msra.mxu0 0.0
  %1198 = vmatprep.subr.mxu0 0.0
  %1199 = vmatpush1.msra.mxu0 0.0
  %1200 = vmatprep.subr.mxu0 0.0
  %1201 = vmatpush1.msra.mxu0 0.0
  %1202 = vmatprep.subr.mxu0 0.0
  %1203 = vmatpush1.msra.mxu0 0.0
  %1204 = vmatprep.subr.mxu0 0.0
  %1205 = vmatpush1.msra.mxu0 0.0
  %1206 = vmatprep.subr.mxu0 0.0
  %1207 = vmatpush1.msra.mxu0 0.0
  %1208 = vmatprep.subr.mxu0 0.0
  %1209 = vmatpush1.msra.mxu0 0.0
  %1210 = vmatprep.subr.mxu0 0.0
  %1211 = vmatpush1.msra.mxu0 0.0
  %1212 = vmatprep.subr.mxu0 0.0
  %1213 = vmatpush1.msra.mxu0 %v1177
  %1214 = vmatprep.subr.mxu0 0.0
  %1215 = vmatpush1.msra.mxu0 %v1176
  %1216 = vmatprep.subr.mxu0 0.0
  %1217 = vmatpush1.msra.mxu0 %v1181
  %1218 = vmatprep.subr.mxu0 0.0
  %1219 = vmatpush1.msra.mxu0 %v1180
  %1220 = vmatprep.subr.mxu0 0.0
  %1221 = vmatpush2.msra.mxu0 0.0
  %1222 = vmatprep.subr.mxu0 0.0
  %1223 = vmatpush2.msra.mxu0 0.0
  %1224 = vmatprep.subr.mxu0 0.0
  %1225 = vmatpush2.msra.mxu0 0.0
  %1226 = vmatprep.subr.mxu0 0.0
  %1227 = vmatpush2.msra.mxu0 0.0
  %1228 = vmatprep.subr.mxu0 0.0
  %1229 = vmatpush2.msra.mxu0 0.0
  %1230 = vmatprep.subr.mxu0 0.0
  %1231 = vmatpush2.msra.mxu0 0.0
  %1232 = vmatprep.subr.mxu0 0.0
  %1233 = vmatpush2.msra.mxu0 0.0
  %1234 = vmatprep.subr.mxu0 0.0
  %1235 = vmatpush2.msra.mxu0 0.0
  %1236 = vmatprep.subr.mxu0 0.0
  %1237 = vmatpush2.msra.mxu0 0.0
  %1238 = vmatprep.subr.mxu0 0.0
  %1239 = vmatpush2.msra.mxu0 0.0
  %1240 = vmatprep.subr.mxu0 0.0
  %1241 = vmatpush2.msra.mxu0 0.0
  %1242 = vmatprep.subr.mxu0 0.0
  %1243 = vmatpush2.msra.mxu0 0.0
  %1244 = vmatprep.subr.mxu0 0.0
  %1245 = vmatpush2.msra.mxu0 0.0
  %1246 = vmatprep.subr.mxu0 0.0
  %1247 = vmatpush2.msra.mxu0 0.0
  %1248 = vmatprep.subr.mxu0 0.0
  %1249 = vmatpush2.msra.mxu0 0.0
  %1250 = vmatprep.subr.mxu0 0.0
  %1251 = vmatpush2.msra.mxu0 0.0
  %1252 = vmatprep.mubr.f32.mxu0 0.0
  %1253 = vmatmul.mubr.f32.gmra.mxu0 %v1183
  %v1254 = vpop.f32.mrf.mxu0
  %v1255 = vadd.f32 0.0, %v1254
  %v1256 = vpop.f32.mrf.mxu0
  %1257 = vmatprep.mubr.f32.mxu0 0.0
  %1258 = vmatmul.mubr.f32.gmra.mxu0 %v1186
  %v1259 = vpop.f32.mrf.mxu0
  %v1260 = vadd.f32 0.0, %v1259
  %v1261 = vpop.f32.mrf.mxu0
  %1262 = vdwg.mxu0
  %1265 = vrot.lane.b32.xlu0 %v1255, 102
  %v1266 = vpop.permute.xlu0 %1265
  %1267 = vrot.lane.b32.xlu0 %v1260, 102
  %v1268 = vpop.permute.xlu0 %1267
  %1269 = vrot.lane.b32.xlu0 %v1255, 76
  %v1270 = vpop.permute.xlu0 %1269
  %1271 = vrot.lane.b32.xlu0 %v1260, 76
  %v1272 = vpop.permute.xlu0 %1271
  %v1273 = vld [vmem:[%s1 + $0xd8] sm:$0xff]
  %v1274 = vld [vmem:[%s1 + $0xe0] sm:$0xff]
  %v1275 = vld [vmem:[%s1 + $0xe8] sm:$0xff]
  %v1276 = vld [vmem:[%s1 + $0xf0] sm:$0x3]
  %v1277 = vsel %vm1168, %v1255, 0
  %v1279 = vsel %vm1168, %v1260, 0
  %v1281 = vsel %vm1168, %v1266, 0
  %v1283 = vsel %vm1168, %v1268, 0
  %v1285 = vsel %vm1168, %v1270, 0
  %v1287 = vsel %vm1168, %v1272, 0
  %vm1289 = vcmask 1041408
  %v1291 = vsel %vm1289, %v1276, 0
  %1293 = vmatprep.subr.mxu0 0.0
  %1294 = vmatpush1.msra.mxu0 0.0
  %1295 = vmatprep.subr.mxu0 0.0
  %1296 = vmatpush1.msra.mxu0 0.0
  %1297 = vmatprep.subr.mxu0 0.0
  %1298 = vmatpush1.msra.mxu0 0.0
  %1299 = vmatprep.subr.mxu0 0.0
  %1300 = vmatpush1.msra.mxu0 0.0
  %1301 = vmatprep.subr.mxu0 0.0
  %1302 = vmatpush1.msra.mxu0 0.0
  %1303 = vmatprep.subr.mxu0 0.0
  %1304 = vmatpush1.msra.mxu0 0.0
  %1305 = vmatprep.subr.mxu0 0.0
  %1306 = vmatpush1.msra.mxu0 0.0
  %1307 = vmatprep.subr.mxu0 0.0
  %1308 = vmatpush1.msra.mxu0 0.0
  %1309 = vmatprep.subr.mxu0 0.0
  %1310 = vmatpush1.msra.mxu0 0.0
  %1311 = vmatprep.subr.mxu0 0.0
  %1312 = vmatpush1.msra.mxu0 0.0
  %1313 = vmatprep.subr.mxu0 0.0
  %1314 = vmatpush1.msra.mxu0 0.0
  %1315 = vmatprep.subr.mxu0 0.0
  %1316 = vmatpush1.msra.mxu0 0.0
  %1317 = vmatprep.subr.mxu0 0.0
  %1318 = vmatpush1.msra.mxu0 %v1291
  %1319 = vmatprep.subr.mxu0 0.0
  %1320 = vmatpush1.msra.mxu0 %v1275
  %1321 = vmatprep.subr.mxu0 0.0
  %1322 = vmatpush1.msra.mxu0 %v1274
  %1323 = vmatprep.subr.mxu0 0.0
  %1324 = vmatpush1.msra.mxu0 %v1273
  %1325 = vmatprep.subr.mxu0 0.0
  %1326 = vmatpush2.msra.mxu0 0.0
  %1327 = vmatprep.subr.mxu0 0.0
  %1328 = vmatpush2.msra.mxu0 0.0
  %1329 = vmatprep.subr.mxu0 0.0
  %1330 = vmatpush2.msra.mxu0 0.0
  %1331 = vmatprep.subr.mxu0 0.0
  %1332 = vmatpush2.msra.mxu0 0.0
  %1333 = vmatprep.subr.mxu0 0.0
  %1334 = vmatpush2.msra.mxu0 0.0
  %1335 = vmatprep.subr.mxu0 0.0
  %1336 = vmatpush2.msra.mxu0 0.0
  %1337 = vmatprep.subr.mxu0 0.0
  %1338 = vmatpush2.msra.mxu0 0.0
  %1339 = vmatprep.subr.mxu0 0.0
  %1340 = vmatpush2.msra.mxu0 0.0
  %1341 = vmatprep.subr.mxu0 0.0
  %1342 = vmatpush2.msra.mxu0 0.0
  %1343 = vmatprep.subr.mxu0 0.0
  %1344 = vmatpush2.msra.mxu0 0.0
  %1345 = vmatprep.subr.mxu0 0.0
  %1346 = vmatpush2.msra.mxu0 0.0
  %1347 = vmatprep.subr.mxu0 0.0
  %1348 = vmatpush2.msra.mxu0 0.0
  %1349 = vmatprep.subr.mxu0 0.0
  %1350 = vmatpush2.msra.mxu0 0.0
  %1351 = vmatprep.subr.mxu0 0.0
  %1352 = vmatpush2.msra.mxu0 0.0
  %1353 = vmatprep.subr.mxu0 0.0
  %1354 = vmatpush2.msra.mxu0 0.0
  %1355 = vmatprep.subr.mxu0 0.0
  %1356 = vmatpush2.msra.mxu0 0.0
  %1357 = vmatprep.mubr.f32.mxu0 0.0
  %1358 = vmatmul.mubr.f32.gmra.mxu0 %v1277
  %v1359 = vpop.f32.mrf.mxu0
  %v1360 = vadd.f32 0.0, %v1359
  %v1361 = vpop.f32.mrf.mxu0
  %1362 = vmatprep.mubr.f32.mxu0 0.0
  %1363 = vmatmul.mubr.f32.gmra.mxu0 %v1279
  %v1364 = vpop.f32.mrf.mxu0
  %v1365 = vadd.f32 0.0, %v1364
  %v1366 = vpop.f32.mrf.mxu0
  %1367 = vmatprep.mubr.f32.mxu0 0.0
  %1368 = vmatmul.mubr.f32.gmra.mxu0 %v1281
  %v1369 = vpop.f32.mrf.mxu0
  %v1370 = vadd.f32 0.0, %v1369
  %v1371 = vpop.f32.mrf.mxu0
  %1372 = vmatprep.mubr.f32.mxu0 0.0
  %1373 = vmatmul.mubr.f32.gmra.mxu0 %v1283
  %v1374 = vpop.f32.mrf.mxu0
  %v1375 = vadd.f32 0.0, %v1374
  %v1376 = vpop.f32.mrf.mxu0
  %1377 = vmatprep.mubr.f32.mxu0 0.0
  %1378 = vmatmul.mubr.f32.gmra.mxu0 %v1285
  %v1379 = vpop.f32.mrf.mxu0
  %v1380 = vadd.f32 0.0, %v1379
  %v1381 = vpop.f32.mrf.mxu0
  %1382 = vmatprep.mubr.f32.mxu0 0.0
  %1383 = vmatmul.mubr.f32.gmra.mxu0 %v1287
  %v1384 = vpop.f32.mrf.mxu0
  %v1385 = vadd.f32 0.0, %v1384
  %v1386 = vpop.f32.mrf.mxu0
  %1387 = vdwg.mxu0
  %1390 = vrot.lane.b32.xlu0 %v1370, 32
  %v1391 = vpop.permute.xlu0 %1390
  %1392 = vrot.lane.b32.xlu0 %v1375, 32
  %v1393 = vpop.permute.xlu0 %1392
  %1398 = vrot.lane.b32.xlu0 %v1380, 64
  %v1399 = vpop.permute.xlu0 %1398
  %1400 = vrot.lane.b32.xlu0 %v1385, 64
  %v1401 = vpop.permute.xlu0 %1400
  %v1404 = vsel %vm17, %v1360, %v1391
  %v1405 = vsel %vm17, %v1365, %v1393
  %vm1406 = vcmask 523264
  %v1407 = vsel %vm1406, %v1404, %v1399
  %v1408 = vsel %vm1406, %v1405, %v1401
  %v1409 = vld [vmem:[%s0 + $0xc0] sm:$0xff]
  %v1410 = vld [vmem:[%s0 + $0xc8] sm:$0xff]
  %v1411 = vld [vmem:[%s0 + $0xd0] sm:$0xff]
  %v1412 = vld [vmem:[%s0 + $0xd8] sm:$0xff]
  %v1413 = vld [vmem:[%s1 + $0xf8] sm:$0xff]
  %v1414 = vld [vmem:[%s1 + $0x100] sm:$0xff]
  %v1415 = vld [vmem:[%s1 + $0x108] sm:$0xff]
  %v1416 = vadd.f32 %v1409, %v1407
  %v1417 = vadd.f32 %v1410, %v1408
  %v1419 = vsel %vm17, %v1413, 0
  %v1422 = vsel %vm17, %v1414, 0
  %v1425 = vsel %vm17, %v1415, 0
  %1427 = vmatprep.subr.mxu0 0.0
  %1428 = vmatpush1.msra.mxu0 0.0
  %1429 = vmatprep.subr.mxu0 0.0
  %1430 = vmatpush1.msra.mxu0 0.0
  %1431 = vmatprep.subr.mxu0 0.0
  %1432 = vmatpush1.msra.mxu0 0.0
  %1433 = vmatprep.subr.mxu0 0.0
  %1434 = vmatpush1.msra.mxu0 0.0
  %1435 = vmatprep.subr.mxu0 0.0
  %1436 = vmatpush1.msra.mxu0 0.0
  %1437 = vmatprep.subr.mxu0 0.0
  %1438 = vmatpush1.msra.mxu0 0.0
  %1439 = vmatprep.subr.mxu0 0.0
  %1440 = vmatpush1.msra.mxu0 0.0
  %1441 = vmatprep.subr.mxu0 0.0
  %1442 = vmatpush1.msra.mxu0 0.0
  %1443 = vmatprep.subr.mxu0 0.0
  %1444 = vmatpush1.msra.mxu0 0.0
  %1445 = vmatprep.subr.mxu0 0.0
  %1446 = vmatpush1.msra.mxu0 0.0
  %1447 = vmatprep.subr.mxu0 0.0
  %1448 = vmatpush1.msra.mxu0 0.0
  %1449 = vmatprep.subr.mxu0 0.0
  %1450 = vmatpush1.msra.mxu0 0.0
  %1451 = vmatprep.subr.mxu0 0.0
  %1452 = vmatpush1.msra.mxu0 %v1412
  %1453 = vmatprep.subr.mxu0 0.0
  %1454 = vmatpush1.msra.mxu0 %v1411
  %1455 = vmatprep.subr.mxu0 0.0
  %1456 = vmatpush1.msra.mxu0 %v1417
  %1457 = vmatprep.subr.mxu0 0.0
  %1458 = vmatpush1.msra.mxu0 %v1416
  %1459 = vmatprep.subr.mxu0 0.0
  %1460 = vmatpush2.msra.mxu0 0.0
  %1461 = vmatprep.subr.mxu0 0.0
  %1462 = vmatpush2.msra.mxu0 0.0
  %1463 = vmatprep.subr.mxu0 0.0
  %1464 = vmatpush2.msra.mxu0 0.0
  %1465 = vmatprep.subr.mxu0 0.0
  %1466 = vmatpush2.msra.mxu0 0.0
  %1467 = vmatprep.subr.mxu0 0.0
  %1468 = vmatpush2.msra.mxu0 0.0
  %1469 = vmatprep.subr.mxu0 0.0
  %1470 = vmatpush2.msra.mxu0 0.0
  %1471 = vmatprep.subr.mxu0 0.0
  %1472 = vmatpush2.msra.mxu0 0.0
  %1473 = vmatprep.subr.mxu0 0.0
  %1474 = vmatpush2.msra.mxu0 0.0
  %1475 = vmatprep.subr.mxu0 0.0
  %1476 = vmatpush2.msra.mxu0 0.0
  %1477 = vmatprep.subr.mxu0 0.0
  %1478 = vmatpush2.msra.mxu0 0.0
  %1479 = vmatprep.subr.mxu0 0.0
  %1480 = vmatpush2.msra.mxu0 0.0
  %1481 = vmatprep.subr.mxu0 0.0
  %1482 = vmatpush2.msra.mxu0 0.0
  %1483 = vmatprep.subr.mxu0 0.0
  %1484 = vmatpush2.msra.mxu0 0.0
  %1485 = vmatprep.subr.mxu0 0.0
  %1486 = vmatpush2.msra.mxu0 0.0
  %1487 = vmatprep.subr.mxu0 0.0
  %1488 = vmatpush2.msra.mxu0 0.0
  %1489 = vmatprep.subr.mxu0 0.0
  %1490 = vmatpush2.msra.mxu0 0.0
  %1491 = vmatprep.mubr.f32.mxu0 0.0
  %1492 = vmatmul.mubr.f32.gmra.mxu0 %v1419
  %v1493 = vpop.f32.mrf.mxu0
  %v1494 = vadd.f32 0.0, %v1493
  %v1495 = vpop.f32.mrf.mxu0
  %1496 = vmatprep.mubr.f32.mxu0 0.0
  %1497 = vmatmul.mubr.f32.gmra.mxu0 %v1422
  %v1498 = vpop.f32.mrf.mxu0
  %v1499 = vadd.f32 0.0, %v1498
  %v1500 = vpop.f32.mrf.mxu0
  %1501 = vmatprep.mubr.f32.mxu0 0.0
  %1502 = vmatmul.mubr.f32.gmra.mxu0 %v1425
  %v1503 = vpop.f32.mrf.mxu0
  %v1504 = vadd.f32 0.0, %v1503
  %v1505 = vpop.f32.mrf.mxu0
  %1506 = vdwg.mxu0
  %1510 = vrot.lane.b32.xlu0 %v1494, 96
  %v1511 = vpop.permute.xlu0 %1510
  %1512 = vrot.lane.b32.xlu0 %v1499, 96
  %v1513 = vpop.permute.xlu0 %1512
  %1514 = vrot.lane.b32.xlu0 %v1504, 96
  %v1515 = vpop.permute.xlu0 %1514
  %1516 = vrot.lane.b32.xlu0 %v1494, 64
  %v1517 = vpop.permute.xlu0 %1516
  %1518 = vrot.lane.b32.xlu0 %v1499, 64
  %v1519 = vpop.permute.xlu0 %1518
  %1520 = vrot.lane.b32.xlu0 %v1504, 64
  %v1521 = vpop.permute.xlu0 %1520
  %v1522 = vld [vmem:[%s1 + $0x110] sm:$0xff]
  %v1523 = vld [vmem:[%s1 + $0x118] sm:$0xff]
  %v1524 = vld [vmem:[%s1 + $0x120] sm:$0xff]
  %v1525 = vld [vmem:[%s1 + $0x128] sm:$0xff]
  %v1526 = vsel %vm17, %v1494, 0
  %v1528 = vsel %vm17, %v1499, 0
  %v1530 = vsel %vm17, %v1504, 0
  %v1532 = vsel %vm17, %v1511, 0
  %v1534 = vsel %vm17, %v1513, 0
  %v1536 = vsel %vm17, %v1515, 0
  %v1538 = vsel %vm17, %v1517, 0
  %v1540 = vsel %vm17, %v1519, 0
  %v1542 = vsel %vm17, %v1521, 0
  %1544 = vmatprep.subr.mxu0 0.0
  %1545 = vmatpush1.msra.mxu0 0.0
  %1546 = vmatprep.subr.mxu0 0.0
  %1547 = vmatpush1.msra.mxu0 0.0
  %1548 = vmatprep.subr.mxu0 0.0
  %1549 = vmatpush1.msra.mxu0 0.0
  %1550 = vmatprep.subr.mxu0 0.0
  %1551 = vmatpush1.msra.mxu0 0.0
  %1552 = vmatprep.subr.mxu0 0.0
  %1553 = vmatpush1.msra.mxu0 0.0
  %1554 = vmatprep.subr.mxu0 0.0
  %1555 = vmatpush1.msra.mxu0 0.0
  %1556 = vmatprep.subr.mxu0 0.0
  %1557 = vmatpush1.msra.mxu0 0.0
  %1558 = vmatprep.subr.mxu0 0.0
  %1559 = vmatpush1.msra.mxu0 0.0
  %1560 = vmatprep.subr.mxu0 0.0
  %1561 = vmatpush1.msra.mxu0 0.0
  %1562 = vmatprep.subr.mxu0 0.0
  %1563 = vmatpush1.msra.mxu0 0.0
  %1564 = vmatprep.subr.mxu0 0.0
  %1565 = vmatpush1.msra.mxu0 0.0
  %1566 = vmatprep.subr.mxu0 0.0
  %1567 = vmatpush1.msra.mxu0 0.0
  %1568 = vmatprep.subr.mxu0 0.0
  %1569 = vmatpush1.msra.mxu0 %v1525
  %1570 = vmatprep.subr.mxu0 0.0
  %1571 = vmatpush1.msra.mxu0 %v1524
  %1572 = vmatprep.subr.mxu0 0.0
  %1573 = vmatpush1.msra.mxu0 %v1523
  %1574 = vmatprep.subr.mxu0 0.0
  %1575 = vmatpush1.msra.mxu0 %v1522
  %1576 = vmatprep.subr.mxu0 0.0
  %1577 = vmatpush2.msra.mxu0 0.0
  %1578 = vmatprep.subr.mxu0 0.0
  %1579 = vmatpush2.msra.mxu0 0.0
  %1580 = vmatprep.subr.mxu0 0.0
  %1581 = vmatpush2.msra.mxu0 0.0
  %1582 = vmatprep.subr.mxu0 0.0
  %1583 = vmatpush2.msra.mxu0 0.0
  %1584 = vmatprep.subr.mxu0 0.0
  %1585 = vmatpush2.msra.mxu0 0.0
  %1586 = vmatprep.subr.mxu0 0.0
  %1587 = vmatpush2.msra.mxu0 0.0
  %1588 = vmatprep.subr.mxu0 0.0
  %1589 = vmatpush2.msra.mxu0 0.0
  %1590 = vmatprep.subr.mxu0 0.0
  %1591 = vmatpush2.msra.mxu0 0.0
  %1592 = vmatprep.subr.mxu0 0.0
  %1593 = vmatpush2.msra.mxu0 0.0
  %1594 = vmatprep.subr.mxu0 0.0
  %1595 = vmatpush2.msra.mxu0 0.0
  %1596 = vmatprep.subr.mxu0 0.0
  %1597 = vmatpush2.msra.mxu0 0.0
  %1598 = vmatprep.subr.mxu0 0.0
  %1599 = vmatpush2.msra.mxu0 0.0
  %1600 = vmatprep.subr.mxu0 0.0
  %1601 = vmatpush2.msra.mxu0 0.0
  %1602 = vmatprep.subr.mxu0 0.0
  %1603 = vmatpush2.msra.mxu0 0.0
  %1604 = vmatprep.subr.mxu0 0.0
  %1605 = vmatpush2.msra.mxu0 0.0
  %1606 = vmatprep.subr.mxu0 0.0
  %1607 = vmatpush2.msra.mxu0 0.0
  %1608 = vmatprep.mubr.f32.mxu0 0.0
  %1609 = vmatmul.mubr.f32.gmra.mxu0 %v1526
  %v1610 = vpop.f32.mrf.mxu0
  %v1611 = vadd.f32 0.0, %v1610
  %v1612 = vpop.f32.mrf.mxu0
  %1613 = vmatprep.mubr.f32.mxu0 0.0
  %1614 = vmatmul.mubr.f32.gmra.mxu0 %v1528
  %v1615 = vpop.f32.mrf.mxu0
  %v1616 = vadd.f32 0.0, %v1615
  %v1617 = vpop.f32.mrf.mxu0
  %1618 = vmatprep.mubr.f32.mxu0 0.0
  %1619 = vmatmul.mubr.f32.gmra.mxu0 %v1530
  %v1620 = vpop.f32.mrf.mxu0
  %v1621 = vadd.f32 0.0, %v1620
  %v1622 = vpop.f32.mrf.mxu0
  %1623 = vmatprep.mubr.f32.mxu0 0.0
  %1624 = vmatmul.mubr.f32.gmra.mxu0 %v1532
  %v1625 = vpop.f32.mrf.mxu0
  %v1626 = vadd.f32 0.0, %v1625
  %v1627 = vpop.f32.mrf.mxu0
  %1628 = vmatprep.mubr.f32.mxu0 0.0
  %1629 = vmatmul.mubr.f32.gmra.mxu0 %v1534
  %v1630 = vpop.f32.mrf.mxu0
  %v1631 = vadd.f32 0.0, %v1630
  %v1632 = vpop.f32.mrf.mxu0
  %1633 = vmatprep.mubr.f32.mxu0 0.0
  %1634 = vmatmul.mubr.f32.gmra.mxu0 %v1536
  %v1635 = vpop.f32.mrf.mxu0
  %v1636 = vadd.f32 0.0, %v1635
  %v1637 = vpop.f32.mrf.mxu0
  %1638 = vmatprep.mubr.f32.mxu0 0.0
  %1639 = vmatmul.mubr.f32.gmra.mxu0 %v1538
  %v1640 = vpop.f32.mrf.mxu0
  %v1641 = vadd.f32 0.0, %v1640
  %v1642 = vpop.f32.mrf.mxu0
  %1643 = vmatprep.mubr.f32.mxu0 0.0
  %1644 = vmatmul.mubr.f32.gmra.mxu0 %v1540
  %v1645 = vpop.f32.mrf.mxu0
  %v1646 = vadd.f32 0.0, %v1645
  %v1647 = vpop.f32.mrf.mxu0
  %1648 = vmatprep.mubr.f32.mxu0 0.0
  %1649 = vmatmul.mubr.f32.gmra.mxu0 %v1542
  %v1650 = vpop.f32.mrf.mxu0
  %v1651 = vadd.f32 0.0, %v1650
  %v1652 = vpop.f32.mrf.mxu0
  %1653 = vdwg.mxu0
  %1657 = vrot.lane.b32.xlu0 %v1626, 42
  %v1658 = vpop.permute.xlu0 %1657
  %1659 = vrot.lane.b32.xlu0 %v1631, 42
  %v1660 = vpop.permute.xlu0 %1659
  %1661 = vrot.lane.b32.xlu0 %v1636, 42
  %v1662 = vpop.permute.xlu0 %1661
  %1669 = vrot.lane.b32.xlu0 %v1641, 84
  %v1670 = vpop.permute.xlu0 %1669
  %1671 = vrot.lane.b32.xlu0 %v1646, 84
  %v1672 = vpop.permute.xlu0 %1671
  %1673 = vrot.lane.b32.xlu0 %v1651, 84
  %v1674 = vpop.permute.xlu0 %1673
  %vm1678 = vcmask 343040
  %v1679 = vsel %vm1678, %v1611, %v1658
  %v1680 = vsel %vm1678, %v1616, %v1660
  %v1681 = vsel %vm1678, %v1621, %v1662
  %vm1682 = vcmask 687104
  %v1683 = vsel %vm1682, %v1679, %v1670
  %v1684 = vsel %vm1682, %v1680, %v1672
  %v1685 = vsel %vm1682, %v1681, %v1674
  %v1686 = vld [vmem:[%s0 + $0xe0] sm:$0xff]
  %v1687 = vld [vmem:[%s0 + $0xe8] sm:$0xff]
  %v1688 = vld [vmem:[%s0 + $0xf0] sm:$0xff]
  %v1689 = vld [vmem:[%s0 + $0xf8] sm:$0xff]
  %v1690 = vld [vmem:[%s0 + $0x100] sm:$0xff]
  %v1691 = vld [vmem:[%s0 + $0x108] sm:$0xff]
  %v1692 = vld [vmem:[%s1 + $0x130] sm:$0xff]
  %v1693 = vld [vmem:[%s1 + $0x138] sm:$0xff]
  %v1694 = vld [vmem:[%s1 + $0x140] sm:$0xff]
  %v1695 = vld [vmem:[%s1 + $0x148] sm:$0xff]
  %v1696 = vadd.f32 %v1686, %v1683
  %v1697 = vadd.f32 %v1687, %v1684
  %v1698 = vadd.f32 %v1688, %v1685
  %v1700 = vsel %vm940, %v1692, 0
  %v1703 = vsel %vm940, %v1693, 0
  %v1706 = vsel %vm940, %v1694, 0
  %v1709 = vsel %vm940, %v1695, 0
  %1711 = vmatprep.subr.mxu0 0.0
  %1712 = vmatpush1.msra.mxu0 0.0
  %1713 = vmatprep.subr.mxu0 0.0
  %1714 = vmatpush1.msra.mxu0 0.0
  %1715 = vmatprep.subr.mxu0 0.0
  %1716 = vmatpush1.msra.mxu0 0.0
  %1717 = vmatprep.subr.mxu0 0.0
  %1718 = vmatpush1.msra.mxu0 0.0
  %1719 = vmatprep.subr.mxu0 0.0
  %1720 = vmatpush1.msra.mxu0 0.0
  %1721 = vmatprep.subr.mxu0 0.0
  %1722 = vmatpush1.msra.mxu0 0.0
  %1723 = vmatprep.subr.mxu0 0.0
  %1724 = vmatpush1.msra.mxu0 0.0
  %1725 = vmatprep.subr.mxu0 0.0
  %1726 = vmatpush1.msra.mxu0 0.0
  %1727 = vmatprep.subr.mxu0 0.0
  %1728 = vmatpush1.msra.mxu0 0.0
  %1729 = vmatprep.subr.mxu0 0.0
  %1730 = vmatpush1.msra.mxu0 0.0
  %1731 = vmatprep.subr.mxu0 0.0
  %1732 = vmatpush1.msra.mxu0 %v1691
  %1733 = vmatprep.subr.mxu0 0.0
  %1734 = vmatpush1.msra.mxu0 %v1690
  %1735 = vmatprep.subr.mxu0 0.0
  %1736 = vmatpush1.msra.mxu0 %v1689
  %1737 = vmatprep.subr.mxu0 0.0
  %1738 = vmatpush1.msra.mxu0 %v1698
  %1739 = vmatprep.subr.mxu0 0.0
  %1740 = vmatpush1.msra.mxu0 %v1697
  %1741 = vmatprep.subr.mxu0 0.0
  %1742 = vmatpush1.msra.mxu0 %v1696
  %1743 = vmatprep.subr.mxu0 0.0
  %1744 = vmatpush2.msra.mxu0 0.0
  %1745 = vmatprep.subr.mxu0 0.0
  %1746 = vmatpush2.msra.mxu0 0.0
  %1747 = vmatprep.subr.mxu0 0.0
  %1748 = vmatpush2.msra.mxu0 0.0
  %1749 = vmatprep.subr.mxu0 0.0
  %1750 = vmatpush2.msra.mxu0 0.0
  %1751 = vmatprep.subr.mxu0 0.0
  %1752 = vmatpush2.msra.mxu0 0.0
  %1753 = vmatprep.subr.mxu0 0.0
  %1754 = vmatpush2.msra.mxu0 0.0
  %1755 = vmatprep.subr.mxu0 0.0
  %1756 = vmatpush2.msra.mxu0 0.0
  %1757 = vmatprep.subr.mxu0 0.0
  %1758 = vmatpush2.msra.mxu0 0.0
  %1759 = vmatprep.subr.mxu0 0.0
  %1760 = vmatpush2.msra.mxu0 0.0
  %1761 = vmatprep.subr.mxu0 0.0
  %1762 = vmatpush2.msra.mxu0 0.0
  %1763 = vmatprep.subr.mxu0 0.0
  %1764 = vmatpush2.msra.mxu0 0.0
  %1765 = vmatprep.subr.mxu0 0.0
  %1766 = vmatpush2.msra.mxu0 0.0
  %1767 = vmatprep.subr.mxu0 0.0
  %1768 = vmatpush2.msra.mxu0 0.0
  %1769 = vmatprep.subr.mxu0 0.0
  %1770 = vmatpush2.msra.mxu0 0.0
  %1771 = vmatprep.subr.mxu0 0.0
  %1772 = vmatpush2.msra.mxu0 0.0
  %1773 = vmatprep.subr.mxu0 0.0
  %1774 = vmatpush2.msra.mxu0 0.0
  %1775 = vmatprep.mubr.f32.mxu0 0.0
  %1776 = vmatmul.mubr.f32.gmra.mxu0 %v1700
  %v1777 = vpop.f32.mrf.mxu0
  %v1778 = vadd.f32 0.0, %v1777
  %v1779 = vpop.f32.mrf.mxu0
  %1780 = vmatprep.mubr.f32.mxu0 0.0
  %1781 = vmatmul.mubr.f32.gmra.mxu0 %v1703
  %v1782 = vpop.f32.mrf.mxu0
  %v1783 = vadd.f32 0.0, %v1782
  %v1784 = vpop.f32.mrf.mxu0
  %1785 = vmatprep.mubr.f32.mxu0 0.0
  %1786 = vmatmul.mubr.f32.gmra.mxu0 %v1706
  %v1787 = vpop.f32.mrf.mxu0
  %v1788 = vadd.f32 0.0, %v1787
  %v1789 = vpop.f32.mrf.mxu0
  %1790 = vmatprep.mubr.f32.mxu0 0.0
  %1791 = vmatmul.mubr.f32.gmra.mxu0 %v1709
  %v1792 = vpop.f32.mrf.mxu0
  %v1793 = vadd.f32 0.0, %v1792
  %v1794 = vpop.f32.mrf.mxu0
  %1795 = vdwg.mxu0
  %1800 = vrot.lane.b32.xlu0 %v1778, 86
  %v1801 = vpop.permute.xlu0 %1800
  %1802 = vrot.lane.b32.xlu0 %v1783, 86
  %v1803 = vpop.permute.xlu0 %1802
  %1804 = vrot.lane.b32.xlu0 %v1788, 86
  %v1805 = vpop.permute.xlu0 %1804
  %1806 = vrot.lane.b32.xlu0 %v1793, 86
  %v1807 = vpop.permute.xlu0 %1806
  %1808 = vrot.lane.b32.xlu0 %v1778, 44
  %v1809 = vpop.permute.xlu0 %1808
  %1810 = vrot.lane.b32.xlu0 %v1783, 44
  %v1811 = vpop.permute.xlu0 %1810
  %1812 = vrot.lane.b32.xlu0 %v1788, 44
  %v1813 = vpop.permute.xlu0 %1812
  %1814 = vrot.lane.b32.xlu0 %v1793, 44
  %v1815 = vpop.permute.xlu0 %1814
  %v1816 = vld [vmem:[%s1 + $0x150] sm:$0xff]
  %v1817 = vld [vmem:[%s1 + $0x158] sm:$0xff]
  %v1818 = vld [vmem:[%s1 + $0x160] sm:$0xff]
  %v1819 = vld [vmem:[%s1 + $0x168] sm:$0xff]
  %v1820 = vld [vmem:[%s1 + $0x170] sm:$0xff]
  %v1821 = vld [vmem:[%s1 + $0x178] sm:$0x3]
  %v1822 = vsel %vm1678, %v1778, 0
  %v1824 = vsel %vm1678, %v1783, 0
  %v1826 = vsel %vm1678, %v1788, 0
  %v1828 = vsel %vm1678, %v1793, 0
  %v1830 = vsel %vm1678, %v1801, 0
  %v1832 = vsel %vm1678, %v1803, 0
  %v1834 = vsel %vm1678, %v1805, 0
  %v1836 = vsel %vm1678, %v1807, 0
  %v1838 = vsel %vm1678, %v1809, 0
  %v1840 = vsel %vm1678, %v1811, 0
  %v1842 = vsel %vm1678, %v1813, 0
  %v1844 = vsel %vm1678, %v1815, 0
  %v1847 = vsel %vm1289, %v1821, 0
  %1849 = vmatprep.subr.mxu0 0.0
  %1850 = vmatpush1.msra.mxu0 0.0
  %1851 = vmatprep.subr.mxu0 0.0
  %1852 = vmatpush1.msra.mxu0 0.0
  %1853 = vmatprep.subr.mxu0 0.0
  %1854 = vmatpush1.msra.mxu0 0.0
  %1855 = vmatprep.subr.mxu0 0.0
  %1856 = vmatpush1.msra.mxu0 0.0
  %1857 = vmatprep.subr.mxu0 0.0
  %1858 = vmatpush1.msra.mxu0 0.0
  %1859 = vmatprep.subr.mxu0 0.0
  %1860 = vmatpush1.msra.mxu0 0.0
  %1861 = vmatprep.subr.mxu0 0.0
  %1862 = vmatpush1.msra.mxu0 0.0
  %1863 = vmatprep.subr.mxu0 0.0
  %1864 = vmatpush1.msra.mxu0 0.0
  %1865 = vmatprep.subr.mxu0 0.0
  %1866 = vmatpush1.msra.mxu0 0.0
  %1867 = vmatprep.subr.mxu0 0.0
  %1868 = vmatpush1.msra.mxu0 0.0
  %1869 = vmatprep.subr.mxu0 0.0
  %1870 = vmatpush1.msra.mxu0 %v1847
  %1871 = vmatprep.subr.mxu0 0.0
  %1872 = vmatpush1.msra.mxu0 %v1820
  %1873 = vmatprep.subr.mxu0 0.0
  %1874 = vmatpush1.msra.mxu0 %v1819
  %1875 = vmatprep.subr.mxu0 0.0
  %1876 = vmatpush1.msra.mxu0 %v1818
  %1877 = vmatprep.subr.mxu0 0.0
  %1878 = vmatpush1.msra.mxu0 %v1817
  %1879 = vmatprep.subr.mxu0 0.0
  %1880 = vmatpush1.msra.mxu0 %v1816
  %1881 = vmatprep.subr.mxu0 0.0
  %1882 = vmatpush2.msra.mxu0 0.0
  %1883 = vmatprep.subr.mxu0 0.0
  %1884 = vmatpush2.msra.mxu0 0.0
  %1885 = vmatprep.subr.mxu0 0.0
  %1886 = vmatpush2.msra.mxu0 0.0
  %1887 = vmatprep.subr.mxu0 0.0
  %1888 = vmatpush2.msra.mxu0 0.0
  %1889 = vmatprep.subr.mxu0 0.0
  %1890 = vmatpush2.msra.mxu0 0.0
  %1891 = vmatprep.subr.mxu0 0.0
  %1892 = vmatpush2.msra.mxu0 0.0
  %1893 = vmatprep.subr.mxu0 0.0
  %1894 = vmatpush2.msra.mxu0 0.0
  %1895 = vmatprep.subr.mxu0 0.0
  %1896 = vmatpush2.msra.mxu0 0.0
  %1897 = vmatprep.subr.mxu0 0.0
  %1898 = vmatpush2.msra.mxu0 0.0
  %1899 = vmatprep.subr.mxu0 0.0
  %1900 = vmatpush2.msra.mxu0 0.0
  %1901 = vmatprep.subr.mxu0 0.0
  %1902 = vmatpush2.msra.mxu0 0.0
  %1903 = vmatprep.subr.mxu0 0.0
  %1904 = vmatpush2.msra.mxu0 0.0
  %1905 = vmatprep.subr.mxu0 0.0
  %1906 = vmatpush2.msra.mxu0 0.0
  %1907 = vmatprep.subr.mxu0 0.0
  %1908 = vmatpush2.msra.mxu0 0.0
  %1909 = vmatprep.subr.mxu0 0.0
  %1910 = vmatpush2.msra.mxu0 0.0
  %1911 = vmatprep.subr.mxu0 0.0
  %1912 = vmatpush2.msra.mxu0 0.0
  %1913 = vmatprep.mubr.f32.mxu0 0.0
  %1914 = vmatmul.mubr.f32.gmra.mxu0 %v1822
  %v1915 = vpop.f32.mrf.mxu0
  %v1916 = vadd.f32 0.0, %v1915
  %v1917 = vpop.f32.mrf.mxu0
  %1918 = vmatprep.mubr.f32.mxu0 0.0
  %1919 = vmatmul.mubr.f32.gmra.mxu0 %v1824
  %v1920 = vpop.f32.mrf.mxu0
  %v1921 = vadd.f32 0.0, %v1920
  %v1922 = vpop.f32.mrf.mxu0
  %1923 = vmatprep.mubr.f32.mxu0 0.0
  %1924 = vmatmul.mubr.f32.gmra.mxu0 %v1826
  %v1925 = vpop.f32.mrf.mxu0
  %v1926 = vadd.f32 0.0, %v1925
  %v1927 = vpop.f32.mrf.mxu0
  %1928 = vmatprep.mubr.f32.mxu0 0.0
  %1929 = vmatmul.mubr.f32.gmra.mxu0 %v1828
  %v1930 = vpop.f32.mrf.mxu0
  %v1931 = vadd.f32 0.0, %v1930
  %v1932 = vpop.f32.mrf.mxu0
  %1933 = vmatprep.mubr.f32.mxu0 0.0
  %1934 = vmatmul.mubr.f32.gmra.mxu0 %v1830
  %v1935 = vpop.f32.mrf.mxu0
  %v1936 = vadd.f32 0.0, %v1935
  %v1937 = vpop.f32.mrf.mxu0
  %1938 = vmatprep.mubr.f32.mxu0 0.0
  %1939 = vmatmul.mubr.f32.gmra.mxu0 %v1832
  %v1940 = vpop.f32.mrf.mxu0
  %v1941 = vadd.f32 0.0, %v1940
  %v1942 = vpop.f32.mrf.mxu0
  %1943 = vmatprep.mubr.f32.mxu0 0.0
  %1944 = vmatmul.mubr.f32.gmra.mxu0 %v1834
  %v1945 = vpop.f32.mrf.mxu0
  %v1946 = vadd.f32 0.0, %v1945
  %v1947 = vpop.f32.mrf.mxu0
  %1948 = vmatprep.mubr.f32.mxu0 0.0
  %1949 = vmatmul.mubr.f32.gmra.mxu0 %v1836
  %v1950 = vpop.f32.mrf.mxu0
  %v1951 = vadd.f32 0.0, %v1950
  %v1952 = vpop.f32.mrf.mxu0
  %1953 = vmatprep.mubr.f32.mxu0 0.0
  %1954 = vmatmul.mubr.f32.gmra.mxu0 %v1838
  %v1955 = vpop.f32.mrf.mxu0
  %v1956 = vadd.f32 0.0, %v1955
  %v1957 = vpop.f32.mrf.mxu0
  %1958 = vmatprep.mubr.f32.mxu0 0.0
  %1959 = vmatmul.mubr.f32.gmra.mxu0 %v1840
  %v1960 = vpop.f32.mrf.mxu0
  %v1961 = vadd.f32 0.0, %v1960
  %v1962 = vpop.f32.mrf.mxu0
  %1963 = vmatprep.mubr.f32.mxu0 0.0
  %1964 = vmatmul.mubr.f32.gmra.mxu0 %v1842
  %v1965 = vpop.f32.mrf.mxu0
  %v1966 = vadd.f32 0.0, %v1965
  %v1967 = vpop.f32.mrf.mxu0
  %1968 = vmatprep.mubr.f32.mxu0 0.0
  %1969 = vmatmul.mubr.f32.gmra.mxu0 %v1844
  %v1970 = vpop.f32.mrf.mxu0
  %v1971 = vadd.f32 0.0, %v1970
  %v1972 = vpop.f32.mrf.mxu0
  %1973 = vdwg.mxu0
  %1978 = vrot.lane.b32.xlu0 %v1936, 32
  %v1979 = vpop.permute.xlu0 %1978
  %1980 = vrot.lane.b32.xlu0 %v1941, 32
  %v1981 = vpop.permute.xlu0 %1980
  %1982 = vrot.lane.b32.xlu0 %v1946, 32
  %v1983 = vpop.permute.xlu0 %1982
  %1984 = vrot.lane.b32.xlu0 %v1951, 32
  %v1985 = vpop.permute.xlu0 %1984
  %1994 = vrot.lane.b32.xlu0 %v1956, 64
  %v1995 = vpop.permute.xlu0 %1994
  %1996 = vrot.lane.b32.xlu0 %v1961, 64
  %v1997 = vpop.permute.xlu0 %1996
  %1998 = vrot.lane.b32.xlu0 %v1966, 64
  %v1999 = vpop.permute.xlu0 %1998
  %2000 = vrot.lane.b32.xlu0 %v1971, 64
  %v2001 = vpop.permute.xlu0 %2000
  %v2006 = vsel %vm17, %v1916, %v1979
  %v2007 = vsel %vm17, %v1921, %v1981
  %v2008 = vsel %vm17, %v1926, %v1983
  %v2009 = vsel %vm17, %v1931, %v1985
  %v2010 = vsel %vm1406, %v2006, %v1995
  %v2011 = vsel %vm1406, %v2007, %v1997
  %v2012 = vsel %vm1406, %v2008, %v1999
  %v2013 = vsel %vm1406, %v2009, %v2001
  %v2014 = vadd.f32 %v2010, 0.5
  %v2015 = vadd.f32 %v2011, 0.5
  %v2016 = vadd.f32 %v2012, 0.5
  %v2017 = vadd.f32 %v2013, 0.5
  %v2018 = vmax.f32 %v2014, 0.0
  %v2019 = vmax.f32 %v2015, 0.0
  %v2020 = vmax.f32 %v2016, 0.0
  %v2021 = vmax.f32 %v2017, 0.0
  %v2022 = vmin.f32 %v2018, 1.0
  %v2023 = vmin.f32 %v2019, 1.0
  %v2024 = vmin.f32 %v2020, 1.0
  %v2025 = vmin.f32 %v2021, 1.0
  %v2026 = vld [vmem:[%s1 + $0x180] sm:$0xff]
  %v2027 = vld [vmem:[%s1 + $0x188] sm:$0xff]
  %v2029 = vsel %vm17, %v2026, 0
  %v2032 = vsel %vm17, %v2027, 0
  %2034 = vmatprep.subr.mxu0 0.0
  %2035 = vmatpush1.msra.mxu0 0.0
  %2036 = vmatprep.subr.mxu0 0.0
  %2037 = vmatpush1.msra.mxu0 0.0
  %2038 = vmatprep.subr.mxu0 0.0
  %2039 = vmatpush1.msra.mxu0 0.0
  %2040 = vmatprep.subr.mxu0 0.0
  %2041 = vmatpush1.msra.mxu0 0.0
  %2042 = vmatprep.subr.mxu0 0.0
  %2043 = vmatpush1.msra.mxu0 0.0
  %2044 = vmatprep.subr.mxu0 0.0
  %2045 = vmatpush1.msra.mxu0 0.0
  %2046 = vmatprep.subr.mxu0 0.0
  %2047 = vmatpush1.msra.mxu0 0.0
  %2048 = vmatprep.subr.mxu0 0.0
  %2049 = vmatpush1.msra.mxu0 0.0
  %2050 = vmatprep.subr.mxu0 0.0
  %2051 = vmatpush1.msra.mxu0 0.0
  %2052 = vmatprep.subr.mxu0 0.0
  %2053 = vmatpush1.msra.mxu0 0.0
  %2054 = vmatprep.subr.mxu0 0.0
  %2055 = vmatpush1.msra.mxu0 0.0
  %2056 = vmatprep.subr.mxu0 0.0
  %2057 = vmatpush1.msra.mxu0 0.0
  %2058 = vmatprep.subr.mxu0 0.0
  %2059 = vmatpush1.msra.mxu0 %v2025
  %2060 = vmatprep.subr.mxu0 0.0
  %2061 = vmatpush1.msra.mxu0 %v2024
  %2062 = vmatprep.subr.mxu0 0.0
  %2063 = vmatpush1.msra.mxu0 %v2023
  %2064 = vmatprep.subr.mxu0 0.0
  %2065 = vmatpush1.msra.mxu0 %v2022
  %2066 = vmatprep.subr.mxu0 0.0
  %2067 = vmatpush2.msra.mxu0 0.0
  %2068 = vmatprep.subr.mxu0 0.0
  %2069 = vmatpush2.msra.mxu0 0.0
  %2070 = vmatprep.subr.mxu0 0.0
  %2071 = vmatpush2.msra.mxu0 0.0
  %2072 = vmatprep.subr.mxu0 0.0
  %2073 = vmatpush2.msra.mxu0 0.0
  %2074 = vmatprep.subr.mxu0 0.0
  %2075 = vmatpush2.msra.mxu0 0.0
  %2076 = vmatprep.subr.mxu0 0.0
  %2077 = vmatpush2.msra.mxu0 0.0
  %2078 = vmatprep.subr.mxu0 0.0
  %2079 = vmatpush2.msra.mxu0 0.0
  %2080 = vmatprep.subr.mxu0 0.0
  %2081 = vmatpush2.msra.mxu0 0.0
  %2082 = vmatprep.subr.mxu0 0.0
  %2083 = vmatpush2.msra.mxu0 0.0
  %2084 = vmatprep.subr.mxu0 0.0
  %2085 = vmatpush2.msra.mxu0 0.0
  %2086 = vmatprep.subr.mxu0 0.0
  %2087 = vmatpush2.msra.mxu0 0.0
  %2088 = vmatprep.subr.mxu0 0.0
  %2089 = vmatpush2.msra.mxu0 0.0
  %2090 = vmatprep.subr.mxu0 0.0
  %2091 = vmatpush2.msra.mxu0 0.0
  %2092 = vmatprep.subr.mxu0 0.0
  %2093 = vmatpush2.msra.mxu0 0.0
  %2094 = vmatprep.subr.mxu0 0.0
  %2095 = vmatpush2.msra.mxu0 0.0
  %2096 = vmatprep.subr.mxu0 0.0
  %2097 = vmatpush2.msra.mxu0 0.0
  %2098 = vmatprep.mubr.f32.mxu0 0.0
  %2099 = vmatmul.mubr.f32.gmra.mxu0 %v2029
  %v2100 = vpop.f32.mrf.mxu0
  %v2101 = vadd.f32 0.0, %v2100
  %v2102 = vpop.f32.mrf.mxu0
  %2103 = vmatprep.mubr.f32.mxu0 0.0
  %2104 = vmatmul.mubr.f32.gmra.mxu0 %v2032
  %v2105 = vpop.f32.mrf.mxu0
  %v2106 = vadd.f32 0.0, %v2105
  %v2107 = vpop.f32.mrf.mxu0
  %2108 = vdwg.mxu0
  %2111 = vrot.lane.b32.xlu0 %v2101, 96
  %v2112 = vpop.permute.xlu0 %2111
  %2113 = vrot.lane.b32.xlu0 %v2106, 96
  %v2114 = vpop.permute.xlu0 %2113
  %2115 = vrot.lane.b32.xlu0 %v2101, 64
  %v2116 = vpop.permute.xlu0 %2115
  %2117 = vrot.lane.b32.xlu0 %v2106, 64
  %v2118 = vpop.permute.xlu0 %2117
  %v2119 = vld [vmem:[%s1 + $0x190] sm:$0xff]
  %v2120 = vld [vmem:[%s1 + $0x198] sm:$0xff]
  %v2121 = vld [vmem:[%s1 + $0x1a0] sm:$0xff]
  %v2122 = vld [vmem:[%s1 + $0x1a8] sm:$0xff]
  %v2123 = vsel %vm17, %v2101, 0
  %v2125 = vsel %vm17, %v2106, 0
  %v2127 = vsel %vm17, %v2112, 0
  %v2129 = vsel %vm17, %v2114, 0
  %v2131 = vsel %vm17, %v2116, 0
  %v2133 = vsel %vm17, %v2118, 0
  %2135 = vmatprep.subr.mxu0 0.0
  %2136 = vmatpush1.msra.mxu0 0.0
  %2137 = vmatprep.subr.mxu0 0.0
  %2138 = vmatpush1.msra.mxu0 0.0
  %2139 = vmatprep.subr.mxu0 0.0
  %2140 = vmatpush1.msra.mxu0 0.0
  %2141 = vmatprep.subr.mxu0 0.0
  %2142 = vmatpush1.msra.mxu0 0.0
  %2143 = vmatprep.subr.mxu0 0.0
  %2144 = vmatpush1.msra.mxu0 0.0
  %2145 = vmatprep.subr.mxu0 0.0
  %2146 = vmatpush1.msra.mxu0 0.0
  %2147 = vmatprep.subr.mxu0 0.0
  %2148 = vmatpush1.msra.mxu0 0.0
  %2149 = vmatprep.subr.mxu0 0.0
  %2150 = vmatpush1.msra.mxu0 0.0
  %2151 = vmatprep.subr.mxu0 0.0
  %2152 = vmatpush1.msra.mxu0 0.0
  %2153 = vmatprep.subr.mxu0 0.0
  %2154 = vmatpush1.msra.mxu0 0.0
  %2155 = vmatprep.subr.mxu0 0.0
  %2156 = vmatpush1.msra.mxu0 0.0
  %2157 = vmatprep.subr.mxu0 0.0
  %2158 = vmatpush1.msra.mxu0 0.0
  %2159 = vmatprep.subr.mxu0 0.0
  %2160 = vmatpush1.msra.mxu0 %v2122
  %2161 = vmatprep.subr.mxu0 0.0
  %2162 = vmatpush1.msra.mxu0 %v2121
  %2163 = vmatprep.subr.mxu0 0.0
  %2164 = vmatpush1.msra.mxu0 %v2120
  %2165 = vmatprep.subr.mxu0 0.0
  %2166 = vmatpush1.msra.mxu0 %v2119
  %2167 = vmatprep.subr.mxu0 0.0
  %2168 = vmatpush2.msra.mxu0 0.0
  %2169 = vmatprep.subr.mxu0 0.0
  %2170 = vmatpush2.msra.mxu0 0.0
  %2171 = vmatprep.subr.mxu0 0.0
  %2172 = vmatpush2.msra.mxu0 0.0
  %2173 = vmatprep.subr.mxu0 0.0
  %2174 = vmatpush2.msra.mxu0 0.0
  %2175 = vmatprep.subr.mxu0 0.0
  %2176 = vmatpush2.msra.mxu0 0.0
  %2177 = vmatprep.subr.mxu0 0.0
  %2178 = vmatpush2.msra.mxu0 0.0
  %2179 = vmatprep.subr.mxu0 0.0
  %2180 = vmatpush2.msra.mxu0 0.0
  %2181 = vmatprep.subr.mxu0 0.0
  %2182 = vmatpush2.msra.mxu0 0.0
  %2183 = vmatprep.subr.mxu0 0.0
  %2184 = vmatpush2.msra.mxu0 0.0
  %2185 = vmatprep.subr.mxu0 0.0
  %2186 = vmatpush2.msra.mxu0 0.0
  %2187 = vmatprep.subr.mxu0 0.0
  %2188 = vmatpush2.msra.mxu0 0.0
  %2189 = vmatprep.subr.mxu0 0.0
  %2190 = vmatpush2.msra.mxu0 0.0
  %2191 = vmatprep.subr.mxu0 0.0
  %2192 = vmatpush2.msra.mxu0 0.0
  %2193 = vmatprep.subr.mxu0 0.0
  %2194 = vmatpush2.msra.mxu0 0.0
  %2195 = vmatprep.subr.mxu0 0.0
  %2196 = vmatpush2.msra.mxu0 0.0
  %2197 = vmatprep.subr.mxu0 0.0
  %2198 = vmatpush2.msra.mxu0 0.0
  %2199 = vmatprep.mubr.f32.mxu0 0.0
  %2200 = vmatmul.mubr.f32.gmra.mxu0 %v2123
  %v2201 = vpop.f32.mrf.mxu0
  %v2202 = vadd.f32 0.0, %v2201
  %v2203 = vpop.f32.mrf.mxu0
  %2204 = vmatprep.mubr.f32.mxu0 0.0
  %2205 = vmatmul.mubr.f32.gmra.mxu0 %v2125
  %v2206 = vpop.f32.mrf.mxu0
  %v2207 = vadd.f32 0.0, %v2206
  %v2208 = vpop.f32.mrf.mxu0
  %2209 = vmatprep.mubr.f32.mxu0 0.0
  %2210 = vmatmul.mubr.f32.gmra.mxu0 %v2127
  %v2211 = vpop.f32.mrf.mxu0
  %v2212 = vadd.f32 0.0, %v2211
  %v2213 = vpop.f32.mrf.mxu0
  %2214 = vmatprep.mubr.f32.mxu0 0.0
  %2215 = vmatmul.mubr.f32.gmra.mxu0 %v2129
  %v2216 = vpop.f32.mrf.mxu0
  %v2217 = vadd.f32 0.0, %v2216
  %v2218 = vpop.f32.mrf.mxu0
  %2219 = vmatprep.mubr.f32.mxu0 0.0
  %2220 = vmatmul.mubr.f32.gmra.mxu0 %v2131
  %v2221 = vpop.f32.mrf.mxu0
  %v2222 = vadd.f32 0.0, %v2221
  %v2223 = vpop.f32.mrf.mxu0
  %2224 = vmatprep.mubr.f32.mxu0 0.0
  %2225 = vmatmul.mubr.f32.gmra.mxu0 %v2133
  %v2226 = vpop.f32.mrf.mxu0
  %v2227 = vadd.f32 0.0, %v2226
  %v2228 = vpop.f32.mrf.mxu0
  %2229 = vdwg.mxu0
  %2232 = vrot.lane.b32.xlu0 %v2212, 16
  %v2233 = vpop.permute.xlu0 %2232
  %2234 = vrot.lane.b32.xlu0 %v2217, 16
  %v2235 = vpop.permute.xlu0 %2234
  %2240 = vrot.lane.b32.xlu0 %v2222, 32
  %v2241 = vpop.permute.xlu0 %2240
  %2242 = vrot.lane.b32.xlu0 %v2227, 32
  %v2243 = vpop.permute.xlu0 %2242
  %vm2246 = vcmask 130048
  %v2247 = vsel %vm2246, %v2202, %v2233
  %v2248 = vsel %vm2246, %v2207, %v2235
  %v2249 = vsel %vm17, %v2247, %v2241
  %v2250 = vsel %vm17, %v2248, %v2243
  %v2251 = vsel %vm940, %v2249, 0.0
  %v2252 = vsel %vm940, %v2250, 0.0
  %2253 = vst [vmem:[%s2] sm:$0xff] %v2251
  %2254 = vst [vmem:[%s2 + $0x8] sm:$0xff] %v2252
  // Predicated region
  $region10: #{run.1} parent=0 // pred_check
    _
  $region11: #{run.1} parent=0 // pred_check_branch
    %2256 = sbr.rel (0) target = $region13
  $region12: #{run.1} parent=0 // pred_region
    _
  $region13: #{run.1} parent=0 // pred_fallthru
    _
  // Predicated region
  $region14: #{run.1} parent=0 // pred_check
    _
  $region15: #{run.1} parent=0 // pred_check_branch
    %2258 = sbr.rel (0) target = $region17
  $region16: #{run.1} parent=0 // pred_region
    _
  $region17: #{run.1} parent=0 // pred_fallthru
    _

</llo_original>
